<compile_context>
chip_gen: v6e
topology: v6e:2x2x1
jax: 0.10.0
libtpu: 0.0.40
codegen_flags: <defaults>
</compile_context>

<pallas_src>
import functools
import math

import jax
import jax.numpy as jnp
from jax.experimental import pallas as pl
from jax.experimental.pallas import tpu as pltpu

# ---- module-level hyperparameters (the globals used by the PyTorch file) ----
EMBED_DIM = 32
HEAD_NUM = 4
POS_NUM = 8          # max sequence length (size of the tril mask buffer)
MULTI = 4
HEAD_DIM = EMBED_DIM // HEAD_NUM
LN_EPS = 1e-5
LEAKY_SLOPE = 0.01   # nn.LeakyReLU default negative_slope


def _layer_norm(z, gamma, beta):
    mu = jnp.mean(z, axis=-1, keepdims=True)
    var = jnp.mean((z - mu) ** 2, axis=-1, keepdims=True)
    return (z - mu) * jax.lax.rsqrt(var + LN_EPS) * gamma + beta


def block_kernel(x_ref, wqkv_ref, bqkv_ref, rsel_ref, gsel_ref, wproj_ref,
                 bproj_ref, ln1_ref, w1_ref, b1_ref, w2_ref, b2_ref, out_ref,
                 *, bt, seq):
    T = seq
    E = EMBED_DIM
    H = HEAD_NUM
    rows = bt * T

    x = x_ref[...]                                   # (rows, E) = (bt*T, E)
    ln_pack = ln1_ref[...]                           # (2, E): ln1 gamma / beta

    # ---- LayerNorm 1 (token-wise, over all rows at once) ----
    ln1 = _layer_norm(x, ln_pack[0:1, :], ln_pack[1:2, :])

    # ---- fused QKV projection; wrapper permuted columns to [Q | K | V], head-major ----
    qkv = jnp.dot(ln1, wqkv_ref[...], preferred_element_type=jnp.float32) + bqkv_ref[...]
    q2 = qkv[:, 0:E]                                 # (rows, E), lane = h*d + dd
    qkv3 = qkv.reshape(bt, T, 3 * E)                 # free view when T == 8 (one sublane tile)
    k3 = qkv3[:, :, E:2 * E]                         # (bt, T, E)
    v3 = qkv3[:, :, 2 * E:3 * E]

    # ---- lane-dense key/value slabs: broadcast each key row s of a sequence to all T
    #      query rows of that sequence (sublane broadcast), concatenate along lanes ----
    prod_parts = []
    v_parts = []
    for s in range(T):
        k_s = jnp.broadcast_to(k3[:, s:s + 1, :], (bt, T, E)).reshape(rows, E)
        v_s = jnp.broadcast_to(v3[:, s:s + 1, :], (bt, T, E)).reshape(rows, E)
        prod_parts.append(q2 * k_s)                  # q_d * k_d, summed over d below (MXU)
        v_parts.append(v_s)
    prod_all = jnp.concatenate(prod_parts, axis=-1)  # (rows, T*E), block s = Q*K_s
    v_all = jnp.concatenate(v_parts, axis=-1)        # (rows, T*E), block s = V_s

    # ---- per-head reduction over head_dim via constant 0/1 selector matmul ----
    # NOTE: no 1/sqrt(dk) scaling -- matches the reference (dk is unused there).
    s32 = jnp.dot(prod_all, rsel_ref[...],
                  preferred_element_type=jnp.float32)          # (rows, H*T), lane = h*T + s

    # ---- causal mask: zero masked scores (bit-identical to the reference's +1e5 trick
    #      because the constant is equal across heads and cancels in the head softmax) ----
    t_idx = jax.lax.broadcasted_iota(jnp.int32, (T, H * T), 0)
    l_idx = jax.lax.broadcasted_iota(jnp.int32, (T, H * T), 1)
    keep2 = (l_idx % T) <= t_idx                                 # (T, H*T) tril pattern
    s3 = jnp.where(keep2[None, :, :], s32.reshape(bt, T, H * T), 0.0)
    s32 = s3.reshape(rows, H * T)

    # ---- softmax over the HEAD axis (torch.softmax(w, dim=1) in the reference):
    #      elementwise max/exp/sum across the H lane-blocks of width T ----
    blocks = [s32[:, h * T:(h + 1) * T] for h in range(H)]
    m = blocks[0]
    for blk in blocks[1:]:
        m = jnp.maximum(m, blk)
    exps = [jnp.exp(blk - m) for blk in blocks]
    den = exps[0]
    for e in exps[1:]:
        den = den + e
    inv = pl.reciprocal(den, approx=True)            # EUP slot, effectively free
    p32 = jnp.concatenate([e * inv for e in exps], axis=-1)      # (rows, H*T)

    # ---- PV: broadcast probs to the value lanes (selector matmul), multiply with V_all,
    #      and fold the lane-reduction over key positions into the (tiled) c_proj weight ----
    pb_all = jnp.dot(p32, gsel_ref[...],
                     preferred_element_type=jnp.float32)         # (rows, T*E)
    a_full = pb_all * v_all
    attn = jnp.dot(a_full, wproj_ref[...],
                   preferred_element_type=jnp.float32) + bproj_ref[...]

    # residual: attention output + layer_normal_1 (as in the reference Block)
    res = attn + ln1

    # ---- LayerNorm 2 (affine folded into W1/b1 in the wrapper) ----
    mu = jnp.mean(res, axis=-1, keepdims=True)
    var = jnp.mean((res - mu) ** 2, axis=-1, keepdims=True)
    ln2 = (res - mu) * jax.lax.rsqrt(var + LN_EPS)

    # ---- MLP: Linear(E, multi*E) -> LeakyReLU -> Linear(multi*E, E) ----
    h1 = jnp.dot(ln2, w1_ref[...], preferred_element_type=jnp.float32) + b1_ref[...]
    h1 = jnp.where(h1 >= 0.0, h1, LEAKY_SLOPE * h1)
    h2 = jnp.dot(h1, w2_ref[...], preferred_element_type=jnp.float32) + b2_ref[...]

    # TODO(synk): Dropout layers are identity here (inference); stochastic dropout omitted.
    out_ref[...] = h2


def init_params(key):
    """Deterministic PyTorch-shaped parameters for Block."""
    ks = jax.random.split(key, 6)
    E, M = EMBED_DIM, MULTI
    s = 0.02
    return dict(
        ln1_g=jnp.ones((E,), jnp.float32),
        ln1_b=jnp.zeros((E,), jnp.float32),
        W_attn=jax.random.normal(ks[0], (3 * E, E), jnp.float32) * s,   # c_atten.weight
        b_attn=jax.random.normal(ks[1], (3 * E,), jnp.float32) * s,
        W_proj=jax.random.normal(ks[2], (E, E), jnp.float32) * s,       # c_proj.weight
        b_proj=jax.random.normal(ks[3], (E,), jnp.float32) * s,
        ln2_g=jnp.ones((E,), jnp.float32),
        ln2_b=jnp.zeros((E,), jnp.float32),
        W1=jax.random.normal(ks[4], (M * E, E), jnp.float32) * s,       # proj[0].weight
        b1=jnp.zeros((M * E,), jnp.float32),
        W2=jax.random.normal(ks[5], (E, M * E), jnp.float32) * s,       # proj[2].weight
        b2=jnp.zeros((E,), jnp.float32),
    )


def _attention_selectors(T):
    """Constant 0/1 selector matrices for the score reduce and prob broadcast."""
    E, H, d = EMBED_DIM, HEAD_NUM, HEAD_DIM
    j = jnp.arange(T * E)            # j = s*E + h*d + dd
    l = jnp.arange(H * T)            # l = h*T + s
    same_head = ((j[:, None] % E) // d) == (l[None, :] // T)
    same_key = (j[:, None] // E) == (l[None, :] % T)
    rsel = (same_head & same_key).astype(jnp.float32)   # (T*E, H*T)
    gsel = rsel.T                                       # (H*T, T*E)
    return rsel, gsel


def block_forward(x, p, *, rows_target=2048):
    B, T, E = x.shape
    assert E == EMBED_DIM and T <= POS_NUM
    M = MULTI
    H, d = HEAD_NUM, HEAD_DIM

    # --- grid sizing: one big row tile per step (overhead amortization). Only add a
    #     second step when each half still carries >=512 rows (v7x has 2 TensorCores
    #     sharing the "parallel" grid; on single-TC v5e/v6e the extra step is ~free).
    bt = max(1, min(B, max(1, rows_target // T)))
    steps = -(-B // bt)
    if steps == 1 and B > 1 and ((B + 1) // 2) * T >= 512:
        steps = 2
    bt = -(-B // steps)
    if steps > 1:
        align = 8 // math.gcd(T, 8)          # keep each (rows, E) block 8-sublane aligned
        bt = -(-bt // align) * align
    B_pad = steps * bt
    if B_pad != B:
        x = jnp.concatenate([x, jnp.zeros((B_pad - B, T, E), x.dtype)], axis=0)
    rows = bt * T
    n_rows = B_pad * T
    x2 = x.reshape(n_rows, E)                # free, contiguous reshape

    # --- fused / packed parameters ---
    # permute c_atten output features to [Q | K | V], head-major within each chunk
    perm = jnp.arange(3 * E).reshape(H, 3, d).transpose(1, 0, 2).reshape(-1)
    w_qkv = p["W_attn"].T[:, perm]                        # (E, 3E)
    b_qkv = p["b_attn"][perm].reshape(1, 3 * E)
    rsel, gsel = _attention_selectors(T)
    w_proj_exp = jnp.tile(p["W_proj"].T, (T, 1))          # (T*E, E): PV reduce folded into c_proj
    b_proj = p["b_proj"].reshape(1, E)
    ln1_pack = jnp.stack([p["ln1_g"], p["ln1_b"]], axis=0)  # (2, E)
    # fold LayerNorm-2 affine into the first MLP matmul
    w1 = p["ln2_g"][:, None] * p["W1"].T                  # (E, M*E)
    b1 = (p["ln2_b"] @ p["W1"].T + p["b1"]).reshape(1, M * E)
    w2 = p["W2"].T                                        # (M*E, E)
    b2 = p["b2"].reshape(1, E)

    fixed = lambda i: (0, 0)
    in_specs = [
        pl.BlockSpec((rows, E), lambda i: (i, 0)),                         # x rows tile
        pl.BlockSpec((E, 3 * E), fixed), pl.BlockSpec((1, 3 * E), fixed),  # fused QKV
        pl.BlockSpec((T * E, H * T), fixed),                               # score selector
        pl.BlockSpec((H * T, T * E), fixed),                               # prob broadcast selector
        pl.BlockSpec((T * E, E), fixed), pl.BlockSpec((1, E), fixed),      # tiled c_proj
        pl.BlockSpec((2, E), fixed),                                       # LN1 gamma/beta
        pl.BlockSpec((E, M * E), fixed), pl.BlockSpec((1, M * E), fixed),  # MLP w1/b1 (LN2 folded)
        pl.BlockSpec((M * E, E), fixed), pl.BlockSpec((1, E), fixed),      # MLP w2/b2
    ]
    out_specs = pl.BlockSpec((rows, E), lambda i: (i, 0))

    kernel = functools.partial(block_kernel, bt=bt, seq=T)
    out2 = pl.pallas_call(
        kernel,
        out_shape=jax.ShapeDtypeStruct((n_rows, E), jnp.float32),
        grid_spec=pltpu.PrefetchScalarGridSpec(
            num_scalar_prefetch=0,
            grid=(steps,),
            in_specs=in_specs,
            out_specs=out_specs,
        ),
        compiler_params=pltpu.CompilerParams(
            dimension_semantics=("parallel",),
            vmem_limit_bytes=48 * 1024 * 1024,
        ),
    )(x2, w_qkv, b_qkv, rsel, gsel, w_proj_exp, b_proj, ln1_pack, w1, b1, w2, b2)

    return out2.reshape(B_pad, T, E)[:B]


def block_reference(x, p):
    """Pure-JAX transcription of the PyTorch forward, for verification."""
    B, T, E = x.shape
    H, d = HEAD_NUM, HEAD_DIM

    def ln(z, g, b):
        mu = jnp.mean(z, -1, keepdims=True)
        var = jnp.mean((z - mu) ** 2, -1, keepdims=True)
        return (z - mu) / jnp.sqrt(var + LN_EPS) * g + b

    ln1 = ln(x, p["ln1_g"], p["ln1_b"])
    qkv = ln1 @ p["W_attn"].T + p["b_attn"]                # (B, T, 3E)
    z = qkv.reshape(B, T, H, 3 * d).transpose(0, 2, 1, 3)  # (B, H, T, 3d)
    q, k, v = jnp.split(z, 3, axis=-1)
    w = q @ jnp.swapaxes(k, -1, -2)                        # (B, H, T, T)
    mask = jnp.tril(jnp.ones((T, T), jnp.float32))
    w = w * mask + (1.0 - mask) * 100000.0
    w = jax.nn.softmax(w, axis=1)                          # softmax over HEAD axis
    a = w @ v                                              # (B, H, T, d)
    a = a.transpose(0, 2, 1, 3).reshape(B, T, E)
    h = a @ p["W_proj"].T + p["b_proj"]
    res = h + ln1
    ln2 = ln(res, p["ln2_g"], p["ln2_b"])
    h1 = ln2 @ p["W1"].T + p["b1"]
    h1 = jnp.where(h1 >= 0.0, h1, LEAKY_SLOPE * h1)
    return h1 @ p["W2"].T + p["b2"]


if __name__ == "__main__":
    key = jax.random.PRNGKey(0)
    kx, kp = jax.random.split(key)
    params = init_params(kp)

    # small canonical shape
    B, T = 2, POS_NUM
    x = jax.random.normal(kx, (B, T, EMBED_DIM), jnp.float32)
    out = jax.block_until_ready(block_forward(x, params))
    ref = jax.block_until_ready(block_reference(x, params))
    assert out.shape == (B, T, EMBED_DIM)
    assert jnp.allclose(out, ref, rtol=2e-3, atol=2e-4), "mismatch vs reference (B=2)"

    # medium batch (single large tile path)
    B2 = 50
    x2 = jax.random.normal(jax.random.PRNGKey(1), (B2, T, EMBED_DIM), jnp.float32)
    out2 = jax.block_until_ready(block_forward(x2, params))
    ref2 = jax.block_until_ready(block_reference(x2, params))
    assert out2.shape == (B2, T, EMBED_DIM)
    assert jnp.allclose(out2, ref2, rtol=2e-3, atol=2e-4), "mismatch vs reference (B=50)"

    # large batch exercises multi-step grid, big (rows, E) tiles and the padding path
    B3 = 700
    x3 = jax.random.normal(jax.random.PRNGKey(2), (B3, T, EMBED_DIM), jnp.float32)
    out3 = jax.block_until_ready(block_forward(x3, params))
    ref3 = jax.block_until_ready(block_reference(x3, params))
    assert out3.shape == (B3, T, EMBED_DIM)
    assert jnp.allclose(out3, ref3, rtol=2e-3, atol=2e-4), "mismatch vs reference (B=700)"

    print("KERNEL_OK")
</pallas_src>

<mosaic_0001>
module attributes {stable_mosaic.version = 11 : i64} {
  func.func @block_kernel(%arg0: i32, %arg1: memref<16x32xf32, #tpu.memory_space<vmem>>, %arg2: memref<32x96xf32, #tpu.memory_space<vmem>>, %arg3: memref<1x96xf32, #tpu.memory_space<vmem>>, %arg4: memref<256x32xf32, #tpu.memory_space<vmem>>, %arg5: memref<32x256xf32, #tpu.memory_space<vmem>>, %arg6: memref<256x32xf32, #tpu.memory_space<vmem>>, %arg7: memref<1x32xf32, #tpu.memory_space<vmem>>, %arg8: memref<2x32xf32, #tpu.memory_space<vmem>>, %arg9: memref<32x128xf32, #tpu.memory_space<vmem>>, %arg10: memref<1x128xf32, #tpu.memory_space<vmem>>, %arg11: memref<128x32xf32, #tpu.memory_space<vmem>>, %arg12: memref<1x32xf32, #tpu.memory_space<vmem>>, %arg13: memref<16x32xf32, #tpu.memory_space<vmem>>) attributes {dimension_semantics = [#tpu.dimension_semantics<parallel>], iteration_bounds = array<i64: 1>, scalar_prefetch = 0 : i64, scratch_operands = 0 : i64, tpu.core_type = #tpu.core_type<tc>, window_params = [{transform_indices = @transform_0, window_bounds = array<i64: 16, 32>}, {pipeline_mode = #tpu.pipeline_mode<synchronous>, transform_indices = @transform_1, window_bounds = array<i64: 32, 96>}, {pipeline_mode = #tpu.pipeline_mode<synchronous>, transform_indices = @transform_2, window_bounds = array<i64: 1, 96>}, {pipeline_mode = #tpu.pipeline_mode<synchronous>, transform_indices = @transform_3, window_bounds = array<i64: 256, 32>}, {pipeline_mode = #tpu.pipeline_mode<synchronous>, transform_indices = @transform_4, window_bounds = array<i64: 32, 256>}, {pipeline_mode = #tpu.pipeline_mode<synchronous>, transform_indices = @transform_5, window_bounds = array<i64: 256, 32>}, {pipeline_mode = #tpu.pipeline_mode<synchronous>, transform_indices = @transform_6, window_bounds = array<i64: 1, 32>}, {pipeline_mode = #tpu.pipeline_mode<synchronous>, transform_indices = @transform_7, window_bounds = array<i64: 2, 32>}, {pipeline_mode = #tpu.pipeline_mode<synchronous>, transform_indices = @transform_8, window_bounds = array<i64: 32, 128>}, {pipeline_mode = #tpu.pipeline_mode<synchronous>, transform_indices = @transform_9, window_bounds = array<i64: 1, 128>}, {pipeline_mode = #tpu.pipeline_mode<synchronous>, transform_indices = @transform_10, window_bounds = array<i64: 128, 32>}, {pipeline_mode = #tpu.pipeline_mode<synchronous>, transform_indices = @transform_11, window_bounds = array<i64: 1, 32>}, {transform_indices = @transform_12, window_bounds = array<i64: 16, 32>}]} {
    %c0 = arith.constant 0 : index
    %c0_0 = arith.constant 0 : index
    %0 = vector.load %arg1[%c0, %c0_0] : memref<16x32xf32, #tpu.memory_space<vmem>>, vector<16x32xf32>
    %c0_1 = arith.constant 0 : index
    %c0_2 = arith.constant 0 : index
    %1 = vector.load %arg8[%c0_1, %c0_2] : memref<2x32xf32, #tpu.memory_space<vmem>>, vector<2x32xf32>
    %2 = vector.extract_strided_slice %1 {offsets = [0, 0], sizes = [1, 32], strides = [1, 1]} : vector<2x32xf32> to vector<1x32xf32>
    %3 = vector.extract_strided_slice %1 {offsets = [1, 0], sizes = [1, 32], strides = [1, 1]} : vector<2x32xf32> to vector<1x32xf32>
    %cst = arith.constant dense<0.000000e+00> : vector<16xf32>
    %4 = vector.multi_reduction <add>, %0, %cst [1] : vector<16x32xf32> to vector<16xf32>
    %5 = vector.shape_cast %4 : vector<16xf32> to vector<16x1xf32>
    %cst_3 = arith.constant 3.200000e+01 : f32
    %6 = vector.broadcast %cst_3 : f32 to vector<16x1xf32>
    %7 = arith.divf %5, %6 : vector<16x1xf32>
    %8 = vector.broadcast %7 : vector<16x1xf32> to vector<16x32xf32>
    %9 = arith.subf %0, %8 : vector<16x32xf32>
    %10 = arith.mulf %9, %9 : vector<16x32xf32>
    %cst_4 = arith.constant dense<0.000000e+00> : vector<16xf32>
    %11 = vector.multi_reduction <add>, %10, %cst_4 [1] : vector<16x32xf32> to vector<16xf32>
    %12 = vector.shape_cast %11 : vector<16xf32> to vector<16x1xf32>
    %cst_5 = arith.constant 3.200000e+01 : f32
    %13 = vector.broadcast %cst_5 : f32 to vector<16x1xf32>
    %14 = arith.divf %12, %13 : vector<16x1xf32>
    %15 = vector.broadcast %7 : vector<16x1xf32> to vector<16x32xf32>
    %16 = arith.subf %0, %15 : vector<16x32xf32>
    %cst_6 = arith.constant 9.99999974E-6 : f32
    %17 = vector.broadcast %cst_6 : f32 to vector<16x1xf32>
    %18 = arith.addf %14, %17 : vector<16x1xf32>
    %19 = math.rsqrt %18 : vector<16x1xf32>
    %20 = vector.broadcast %19 : vector<16x1xf32> to vector<16x32xf32>
    %21 = arith.mulf %16, %20 : vector<16x32xf32>
    %22 = vector.broadcast %2 : vector<1x32xf32> to vector<16x32xf32>
    %23 = arith.mulf %21, %22 : vector<16x32xf32>
    %24 = vector.broadcast %3 : vector<1x32xf32> to vector<16x32xf32>
    %25 = arith.addf %23, %24 : vector<16x32xf32>
    %c0_7 = arith.constant 0 : index
    %c0_8 = arith.constant 0 : index
    %26 = vector.load %arg2[%c0_7, %c0_8] : memref<32x96xf32, #tpu.memory_space<vmem>>, vector<32x96xf32>
    %cst_9 = arith.constant dense<0.000000e+00> : vector<16x96xf32>
    %27 = tpu.matmul %25, %26, %cst_9 {dimension_numbers = #tpu.dot_dimension_numbers<[1], [0], [0], [1], [0, 0, 1, 1], [], []>} : vector<16x32xf32>, vector<32x96xf32>, vector<16x96xf32> -> vector<16x96xf32>
    %c0_10 = arith.constant 0 : index
    %c0_11 = arith.constant 0 : index
    %28 = vector.load %arg3[%c0_10, %c0_11] : memref<1x96xf32, #tpu.memory_space<vmem>>, vector<1x96xf32>
    %29 = vector.broadcast %28 : vector<1x96xf32> to vector<16x96xf32>
    %30 = arith.addf %27, %29 : vector<16x96xf32>
    %31 = vector.extract_strided_slice %30 {offsets = [0, 0], sizes = [16, 32], strides = [1, 1]} : vector<16x96xf32> to vector<16x32xf32>
    %32 = vector.shape_cast %30 : vector<16x96xf32> to vector<2x8x96xf32>
    %33 = vector.extract_strided_slice %32 {offsets = [0, 0, 32], sizes = [2, 8, 32], strides = [1, 1, 1]} : vector<2x8x96xf32> to vector<2x8x32xf32>
    %34 = vector.extract_strided_slice %32 {offsets = [0, 0, 64], sizes = [2, 8, 32], strides = [1, 1, 1]} : vector<2x8x96xf32> to vector<2x8x32xf32>
    %35 = vector.extract_strided_slice %33 {offsets = [0, 0, 0], sizes = [2, 1, 32], strides = [1, 1, 1]} : vector<2x8x32xf32> to vector<2x1x32xf32>
    %36 = vector.shape_cast %35 : vector<2x1x32xf32> to vector<2x1x32xf32>
    %37 = vector.broadcast %36 : vector<2x1x32xf32> to vector<2x8x32xf32>
    %38 = vector.shape_cast %37 : vector<2x8x32xf32> to vector<16x32xf32>
    %39 = vector.extract_strided_slice %34 {offsets = [0, 0, 0], sizes = [2, 1, 32], strides = [1, 1, 1]} : vector<2x8x32xf32> to vector<2x1x32xf32>
    %40 = vector.shape_cast %39 : vector<2x1x32xf32> to vector<2x1x32xf32>
    %41 = vector.broadcast %40 : vector<2x1x32xf32> to vector<2x8x32xf32>
    %42 = vector.shape_cast %41 : vector<2x8x32xf32> to vector<16x32xf32>
    %43 = arith.mulf %31, %38 : vector<16x32xf32>
    %44 = vector.extract_strided_slice %33 {offsets = [0, 1, 0], sizes = [2, 1, 32], strides = [1, 1, 1]} : vector<2x8x32xf32> to vector<2x1x32xf32>
    %45 = vector.shape_cast %44 : vector<2x1x32xf32> to vector<2x1x32xf32>
    %46 = vector.broadcast %45 : vector<2x1x32xf32> to vector<2x8x32xf32>
    %47 = vector.shape_cast %46 : vector<2x8x32xf32> to vector<16x32xf32>
    %48 = vector.extract_strided_slice %34 {offsets = [0, 1, 0], sizes = [2, 1, 32], strides = [1, 1, 1]} : vector<2x8x32xf32> to vector<2x1x32xf32>
    %49 = vector.shape_cast %48 : vector<2x1x32xf32> to vector<2x1x32xf32>
    %50 = vector.broadcast %49 : vector<2x1x32xf32> to vector<2x8x32xf32>
    %51 = vector.shape_cast %50 : vector<2x8x32xf32> to vector<16x32xf32>
    %52 = arith.mulf %31, %47 : vector<16x32xf32>
    %53 = vector.extract_strided_slice %33 {offsets = [0, 2, 0], sizes = [2, 1, 32], strides = [1, 1, 1]} : vector<2x8x32xf32> to vector<2x1x32xf32>
    %54 = vector.shape_cast %53 : vector<2x1x32xf32> to vector<2x1x32xf32>
    %55 = vector.broadcast %54 : vector<2x1x32xf32> to vector<2x8x32xf32>
    %56 = vector.shape_cast %55 : vector<2x8x32xf32> to vector<16x32xf32>
    %57 = vector.extract_strided_slice %34 {offsets = [0, 2, 0], sizes = [2, 1, 32], strides = [1, 1, 1]} : vector<2x8x32xf32> to vector<2x1x32xf32>
    %58 = vector.shape_cast %57 : vector<2x1x32xf32> to vector<2x1x32xf32>
    %59 = vector.broadcast %58 : vector<2x1x32xf32> to vector<2x8x32xf32>
    %60 = vector.shape_cast %59 : vector<2x8x32xf32> to vector<16x32xf32>
    %61 = arith.mulf %31, %56 : vector<16x32xf32>
    %62 = vector.extract_strided_slice %33 {offsets = [0, 3, 0], sizes = [2, 1, 32], strides = [1, 1, 1]} : vector<2x8x32xf32> to vector<2x1x32xf32>
    %63 = vector.shape_cast %62 : vector<2x1x32xf32> to vector<2x1x32xf32>
    %64 = vector.broadcast %63 : vector<2x1x32xf32> to vector<2x8x32xf32>
    %65 = vector.shape_cast %64 : vector<2x8x32xf32> to vector<16x32xf32>
    %66 = vector.extract_strided_slice %34 {offsets = [0, 3, 0], sizes = [2, 1, 32], strides = [1, 1, 1]} : vector<2x8x32xf32> to vector<2x1x32xf32>
    %67 = vector.shape_cast %66 : vector<2x1x32xf32> to vector<2x1x32xf32>
    %68 = vector.broadcast %67 : vector<2x1x32xf32> to vector<2x8x32xf32>
    %69 = vector.shape_cast %68 : vector<2x8x32xf32> to vector<16x32xf32>
    %70 = arith.mulf %31, %65 : vector<16x32xf32>
    %71 = vector.extract_strided_slice %33 {offsets = [0, 4, 0], sizes = [2, 1, 32], strides = [1, 1, 1]} : vector<2x8x32xf32> to vector<2x1x32xf32>
    %72 = vector.shape_cast %71 : vector<2x1x32xf32> to vector<2x1x32xf32>
    %73 = vector.broadcast %72 : vector<2x1x32xf32> to vector<2x8x32xf32>
    %74 = vector.shape_cast %73 : vector<2x8x32xf32> to vector<16x32xf32>
    %75 = vector.extract_strided_slice %34 {offsets = [0, 4, 0], sizes = [2, 1, 32], strides = [1, 1, 1]} : vector<2x8x32xf32> to vector<2x1x32xf32>
    %76 = vector.shape_cast %75 : vector<2x1x32xf32> to vector<2x1x32xf32>
    %77 = vector.broadcast %76 : vector<2x1x32xf32> to vector<2x8x32xf32>
    %78 = vector.shape_cast %77 : vector<2x8x32xf32> to vector<16x32xf32>
    %79 = arith.mulf %31, %74 : vector<16x32xf32>
    %80 = vector.extract_strided_slice %33 {offsets = [0, 5, 0], sizes = [2, 1, 32], strides = [1, 1, 1]} : vector<2x8x32xf32> to vector<2x1x32xf32>
    %81 = vector.shape_cast %80 : vector<2x1x32xf32> to vector<2x1x32xf32>
    %82 = vector.broadcast %81 : vector<2x1x32xf32> to vector<2x8x32xf32>
    %83 = vector.shape_cast %82 : vector<2x8x32xf32> to vector<16x32xf32>
    %84 = vector.extract_strided_slice %34 {offsets = [0, 5, 0], sizes = [2, 1, 32], strides = [1, 1, 1]} : vector<2x8x32xf32> to vector<2x1x32xf32>
    %85 = vector.shape_cast %84 : vector<2x1x32xf32> to vector<2x1x32xf32>
    %86 = vector.broadcast %85 : vector<2x1x32xf32> to vector<2x8x32xf32>
    %87 = vector.shape_cast %86 : vector<2x8x32xf32> to vector<16x32xf32>
    %88 = arith.mulf %31, %83 : vector<16x32xf32>
    %89 = vector.extract_strided_slice %33 {offsets = [0, 6, 0], sizes = [2, 1, 32], strides = [1, 1, 1]} : vector<2x8x32xf32> to vector<2x1x32xf32>
    %90 = vector.shape_cast %89 : vector<2x1x32xf32> to vector<2x1x32xf32>
    %91 = vector.broadcast %90 : vector<2x1x32xf32> to vector<2x8x32xf32>
    %92 = vector.shape_cast %91 : vector<2x8x32xf32> to vector<16x32xf32>
    %93 = vector.extract_strided_slice %34 {offsets = [0, 6, 0], sizes = [2, 1, 32], strides = [1, 1, 1]} : vector<2x8x32xf32> to vector<2x1x32xf32>
    %94 = vector.shape_cast %93 : vector<2x1x32xf32> to vector<2x1x32xf32>
    %95 = vector.broadcast %94 : vector<2x1x32xf32> to vector<2x8x32xf32>
    %96 = vector.shape_cast %95 : vector<2x8x32xf32> to vector<16x32xf32>
    %97 = arith.mulf %31, %92 : vector<16x32xf32>
    %98 = vector.extract_strided_slice %33 {offsets = [0, 7, 0], sizes = [2, 1, 32], strides = [1, 1, 1]} : vector<2x8x32xf32> to vector<2x1x32xf32>
    %99 = vector.shape_cast %98 : vector<2x1x32xf32> to vector<2x1x32xf32>
    %100 = vector.broadcast %99 : vector<2x1x32xf32> to vector<2x8x32xf32>
    %101 = vector.shape_cast %100 : vector<2x8x32xf32> to vector<16x32xf32>
    %102 = vector.extract_strided_slice %34 {offsets = [0, 7, 0], sizes = [2, 1, 32], strides = [1, 1, 1]} : vector<2x8x32xf32> to vector<2x1x32xf32>
    %103 = vector.shape_cast %102 : vector<2x1x32xf32> to vector<2x1x32xf32>
    %104 = vector.broadcast %103 : vector<2x1x32xf32> to vector<2x8x32xf32>
    %105 = vector.shape_cast %104 : vector<2x8x32xf32> to vector<16x32xf32>
    %106 = arith.mulf %31, %101 : vector<16x32xf32>
    %107 = tpu.concatenate %43, %52, %61, %70, %79, %88, %97, %106 in 1 : vector<16x32xf32>, vector<16x32xf32>, vector<16x32xf32>, vector<16x32xf32>, vector<16x32xf32>, vector<16x32xf32>, vector<16x32xf32>, vector<16x32xf32> -> vector<16x256xf32>
    %108 = tpu.concatenate %42, %51, %60, %69, %78, %87, %96, %105 in 1 : vector<16x32xf32>, vector<16x32xf32>, vector<16x32xf32>, vector<16x32xf32>, vector<16x32xf32>, vector<16x32xf32>, vector<16x32xf32>, vector<16x32xf32> -> vector<16x256xf32>
    %c0_12 = arith.constant 0 : index
    %c0_13 = arith.constant 0 : index
    %109 = vector.load %arg4[%c0_12, %c0_13] : memref<256x32xf32, #tpu.memory_space<vmem>>, vector<256x32xf32>
    %cst_14 = arith.constant dense<0.000000e+00> : vector<16x32xf32>
    %110 = tpu.matmul %107, %109, %cst_14 {dimension_numbers = #tpu.dot_dimension_numbers<[1], [0], [0], [1], [0, 0, 1, 1], [], []>} : vector<16x256xf32>, vector<256x32xf32>, vector<16x32xf32> -> vector<16x32xf32>
    %111 = tpu.iota {dimensions = array<i32: 0>} : vector<8x32xi32>
    %112 = tpu.iota {dimensions = array<i32: 1>} : vector<8x32xi32>
    %c8_i32 = arith.constant 8 : i32
    %c0_i32 = arith.constant 0 : i32
    %113 = arith.cmpi eq, %c8_i32, %c0_i32 : i32
    %c1_i32 = arith.constant 1 : i32
    %114 = arith.select %113, %c1_i32, %c8_i32 : i32
    %115 = vector.broadcast %114 : i32 to vector<8x32xi32>
    %116 = arith.remsi %112, %115 : vector<8x32xi32>
    %c0_i32_15 = arith.constant 0 : i32
    %117 = vector.broadcast %c0_i32_15 : i32 to vector<8x32xi32>
    %118 = arith.cmpi ne, %116, %117 : vector<8x32xi32>
    %c0_i32_16 = arith.constant 0 : i32
    %119 = vector.broadcast %c0_i32_16 : i32 to vector<8x32xi32>
    %120 = arith.cmpi slt, %116, %119 : vector<8x32xi32>
    %c0_i32_17 = arith.constant 0 : i32
    %121 = arith.cmpi slt, %114, %c0_i32_17 : i32
    %122 = vector.broadcast %121 : i1 to vector<8x32xi1>
    %123 = vector.broadcast %122 : vector<8x32xi1> to vector<8x32xi1>
    %124 = arith.xori %120, %123 : vector<8x32xi1>
    %125 = arith.andi %124, %118 : vector<8x32xi1>
    %126 = vector.broadcast %114 : i32 to vector<8x32xi32>
    %127 = arith.addi %116, %126 : vector<8x32xi32>
    %128 = arith.select %125, %127, %116 : vector<8x32xi1>, vector<8x32xi32>
    %129 = arith.cmpi sle, %128, %111 : vector<8x32xi32>
    %130 = vector.shape_cast %129 : vector<8x32xi1> to vector<1x8x32xi1>
    %131 = vector.shape_cast %110 : vector<16x32xf32> to vector<2x8x32xf32>
    %cst_18 = arith.constant 0.000000e+00 : f32
    %132 = vector.shape_cast %130 : vector<1x8x32xi1> to vector<1x8x32xi1>
    %133 = vector.broadcast %132 : vector<1x8x32xi1> to vector<2x8x32xi1>
    %134 = vector.broadcast %cst_18 : f32 to vector<2x8x32xf32>
    %135 = arith.select %133, %131, %134 : vector<2x8x32xi1>, vector<2x8x32xf32>
    %136 = vector.shape_cast %135 : vector<2x8x32xf32> to vector<16x32xf32>
    %137 = vector.extract_strided_slice %136 {offsets = [0, 0], sizes = [16, 8], strides = [1, 1]} : vector<16x32xf32> to vector<16x8xf32>
    %138 = vector.extract_strided_slice %136 {offsets = [0, 8], sizes = [16, 8], strides = [1, 1]} : vector<16x32xf32> to vector<16x8xf32>
    %139 = vector.extract_strided_slice %136 {offsets = [0, 16], sizes = [16, 8], strides = [1, 1]} : vector<16x32xf32> to vector<16x8xf32>
    %140 = vector.extract_strided_slice %136 {offsets = [0, 24], sizes = [16, 8], strides = [1, 1]} : vector<16x32xf32> to vector<16x8xf32>
    %141 = arith.maximumf %137, %138 : vector<16x8xf32>
    %142 = arith.maximumf %141, %139 : vector<16x8xf32>
    %143 = arith.maximumf %142, %140 : vector<16x8xf32>
    %144 = arith.subf %137, %143 : vector<16x8xf32>
    %145 = math.exp %144 : vector<16x8xf32>
    %146 = arith.subf %138, %143 : vector<16x8xf32>
    %147 = math.exp %146 : vector<16x8xf32>
    %148 = arith.subf %139, %143 : vector<16x8xf32>
    %149 = math.exp %148 : vector<16x8xf32>
    %150 = arith.subf %140, %143 : vector<16x8xf32>
    %151 = math.exp %150 : vector<16x8xf32>
    %152 = arith.addf %145, %147 : vector<16x8xf32>
    %153 = arith.addf %152, %149 : vector<16x8xf32>
    %154 = arith.addf %153, %151 : vector<16x8xf32>
    %155 = tpu.reciprocal %154 {approx = true} : vector<16x8xf32> -> vector<16x8xf32>
    %156 = arith.mulf %145, %155 : vector<16x8xf32>
    %157 = arith.mulf %147, %155 : vector<16x8xf32>
    %158 = arith.mulf %149, %155 : vector<16x8xf32>
    %159 = arith.mulf %151, %155 : vector<16x8xf32>
    %160 = tpu.concatenate %156, %157, %158, %159 in 1 : vector<16x8xf32>, vector<16x8xf32>, vector<16x8xf32>, vector<16x8xf32> -> vector<16x32xf32>
    %c0_19 = arith.constant 0 : index
    %c0_20 = arith.constant 0 : index
    %161 = vector.load %arg5[%c0_19, %c0_20] : memref<32x256xf32, #tpu.memory_space<vmem>>, vector<32x256xf32>
    %cst_21 = arith.constant dense<0.000000e+00> : vector<16x256xf32>
    %162 = tpu.matmul %160, %161, %cst_21 {dimension_numbers = #tpu.dot_dimension_numbers<[1], [0], [0], [1], [0, 0, 1, 1], [], []>} : vector<16x32xf32>, vector<32x256xf32>, vector<16x256xf32> -> vector<16x256xf32>
    %163 = arith.mulf %162, %108 : vector<16x256xf32>
    %c0_22 = arith.constant 0 : index
    %c0_23 = arith.constant 0 : index
    %164 = vector.load %arg6[%c0_22, %c0_23] : memref<256x32xf32, #tpu.memory_space<vmem>>, vector<256x32xf32>
    %cst_24 = arith.constant dense<0.000000e+00> : vector<16x32xf32>
    %165 = tpu.matmul %163, %164, %cst_24 {dimension_numbers = #tpu.dot_dimension_numbers<[1], [0], [0], [1], [0, 0, 1, 1], [], []>} : vector<16x256xf32>, vector<256x32xf32>, vector<16x32xf32> -> vector<16x32xf32>
    %c0_25 = arith.constant 0 : index
    %c0_26 = arith.constant 0 : index
    %166 = vector.load %arg7[%c0_25, %c0_26] : memref<1x32xf32, #tpu.memory_space<vmem>>, vector<1x32xf32>
    %167 = vector.broadcast %166 : vector<1x32xf32> to vector<16x32xf32>
    %168 = arith.addf %165, %167 : vector<16x32xf32>
    %169 = arith.addf %168, %25 : vector<16x32xf32>
    %cst_27 = arith.constant dense<0.000000e+00> : vector<16xf32>
    %170 = vector.multi_reduction <add>, %169, %cst_27 [1] : vector<16x32xf32> to vector<16xf32>
    %171 = vector.shape_cast %170 : vector<16xf32> to vector<16x1xf32>
    %cst_28 = arith.constant 3.200000e+01 : f32
    %172 = vector.broadcast %cst_28 : f32 to vector<16x1xf32>
    %173 = arith.divf %171, %172 : vector<16x1xf32>
    %174 = vector.broadcast %173 : vector<16x1xf32> to vector<16x32xf32>
    %175 = arith.subf %169, %174 : vector<16x32xf32>
    %176 = arith.mulf %175, %175 : vector<16x32xf32>
    %cst_29 = arith.constant dense<0.000000e+00> : vector<16xf32>
    %177 = vector.multi_reduction <add>, %176, %cst_29 [1] : vector<16x32xf32> to vector<16xf32>
    %178 = vector.shape_cast %177 : vector<16xf32> to vector<16x1xf32>
    %cst_30 = arith.constant 3.200000e+01 : f32
    %179 = vector.broadcast %cst_30 : f32 to vector<16x1xf32>
    %180 = arith.divf %178, %179 : vector<16x1xf32>
    %181 = vector.broadcast %173 : vector<16x1xf32> to vector<16x32xf32>
    %182 = arith.subf %169, %181 : vector<16x32xf32>
    %cst_31 = arith.constant 9.99999974E-6 : f32
    %183 = vector.broadcast %cst_31 : f32 to vector<16x1xf32>
    %184 = arith.addf %180, %183 : vector<16x1xf32>
    %185 = math.rsqrt %184 : vector<16x1xf32>
    %186 = vector.broadcast %185 : vector<16x1xf32> to vector<16x32xf32>
    %187 = arith.mulf %182, %186 : vector<16x32xf32>
    %c0_32 = arith.constant 0 : index
    %c0_33 = arith.constant 0 : index
    %188 = vector.load %arg9[%c0_32, %c0_33] : memref<32x128xf32, #tpu.memory_space<vmem>>, vector<32x128xf32>
    %cst_34 = arith.constant dense<0.000000e+00> : vector<16x128xf32>
    %189 = tpu.matmul %187, %188, %cst_34 {dimension_numbers = #tpu.dot_dimension_numbers<[1], [0], [0], [1], [0, 0, 1, 1], [], []>} : vector<16x32xf32>, vector<32x128xf32>, vector<16x128xf32> -> vector<16x128xf32>
    %c0_35 = arith.constant 0 : index
    %c0_36 = arith.constant 0 : index
    %190 = vector.load %arg10[%c0_35, %c0_36] : memref<1x128xf32, #tpu.memory_space<vmem>>, vector<1x128xf32>
    %191 = vector.broadcast %190 : vector<1x128xf32> to vector<16x128xf32>
    %192 = arith.addf %189, %191 : vector<16x128xf32>
    %cst_37 = arith.constant 0.000000e+00 : f32
    %193 = vector.broadcast %cst_37 : f32 to vector<16x128xf32>
    %194 = arith.cmpf oge, %192, %193 : vector<16x128xf32>
    %cst_38 = arith.constant 0.00999999977 : f32
    %195 = vector.broadcast %cst_38 : f32 to vector<16x128xf32>
    %196 = arith.mulf %195, %192 : vector<16x128xf32>
    %197 = arith.select %194, %192, %196 : vector<16x128xi1>, vector<16x128xf32>
    %c0_39 = arith.constant 0 : index
    %c0_40 = arith.constant 0 : index
    %198 = vector.load %arg11[%c0_39, %c0_40] : memref<128x32xf32, #tpu.memory_space<vmem>>, vector<128x32xf32>
    %cst_41 = arith.constant dense<0.000000e+00> : vector<16x32xf32>
    %199 = tpu.matmul %197, %198, %cst_41 {dimension_numbers = #tpu.dot_dimension_numbers<[1], [0], [0], [1], [0, 0, 1, 1], [], []>} : vector<16x128xf32>, vector<128x32xf32>, vector<16x32xf32> -> vector<16x32xf32>
    %c0_42 = arith.constant 0 : index
    %c0_43 = arith.constant 0 : index
    %200 = vector.load %arg12[%c0_42, %c0_43] : memref<1x32xf32, #tpu.memory_space<vmem>>, vector<1x32xf32>
    %201 = vector.broadcast %200 : vector<1x32xf32> to vector<16x32xf32>
    %202 = arith.addf %199, %201 : vector<16x32xf32>
    %c0_44 = arith.constant 0 : index
    %c0_45 = arith.constant 0 : index
    %203 = vector.load %arg13[%c0_44, %c0_45] : memref<16x32xf32, #tpu.memory_space<vmem>>, vector<16x32xf32>
    tpu.vector_store %arg13[%c0_44, %c0_45], %202 {strides = array<i32>} : memref<16x32xf32, #tpu.memory_space<vmem>>, vector<16x32xf32>,
    return
  }
  func.func @transform_0(%arg0: i32) -> (i32, i32) {
    %c0_i32 = arith.constant 0 : i32
    %c0_i32_0 = arith.constant 0 : i32
    return %arg0, %c0_i32 : i32, i32
  }
  func.func @transform_1(%arg0: i32) -> (i32, i32) {
    %c0_i32 = arith.constant 0 : i32
    %c0_i32_0 = arith.constant 0 : i32
    %c0_i32_1 = arith.constant 0 : i32
    return %c0_i32, %c0_i32_0 : i32, i32
  }
  func.func @transform_2(%arg0: i32) -> (i32, i32) {
    %c0_i32 = arith.constant 0 : i32
    %c0_i32_0 = arith.constant 0 : i32
    %c0_i32_1 = arith.constant 0 : i32
    return %c0_i32, %c0_i32_0 : i32, i32
  }
  func.func @transform_3(%arg0: i32) -> (i32, i32) {
    %c0_i32 = arith.constant 0 : i32
    %c0_i32_0 = arith.constant 0 : i32
    %c0_i32_1 = arith.constant 0 : i32
    return %c0_i32, %c0_i32_0 : i32, i32
  }
  func.func @transform_4(%arg0: i32) -> (i32, i32) {
    %c0_i32 = arith.constant 0 : i32
    %c0_i32_0 = arith.constant 0 : i32
    %c0_i32_1 = arith.constant 0 : i32
    return %c0_i32, %c0_i32_0 : i32, i32
  }
  func.func @transform_5(%arg0: i32) -> (i32, i32) {
    %c0_i32 = arith.constant 0 : i32
    %c0_i32_0 = arith.constant 0 : i32
    %c0_i32_1 = arith.constant 0 : i32
    return %c0_i32, %c0_i32_0 : i32, i32
  }
  func.func @transform_6(%arg0: i32) -> (i32, i32) {
    %c0_i32 = arith.constant 0 : i32
    %c0_i32_0 = arith.constant 0 : i32
    %c0_i32_1 = arith.constant 0 : i32
    return %c0_i32, %c0_i32_0 : i32, i32
  }
  func.func @transform_7(%arg0: i32) -> (i32, i32) {
    %c0_i32 = arith.constant 0 : i32
    %c0_i32_0 = arith.constant 0 : i32
    %c0_i32_1 = arith.constant 0 : i32
    return %c0_i32, %c0_i32_0 : i32, i32
  }
  func.func @transform_8(%arg0: i32) -> (i32, i32) {
    %c0_i32 = arith.constant 0 : i32
    %c0_i32_0 = arith.constant 0 : i32
    %c0_i32_1 = arith.constant 0 : i32
    return %c0_i32, %c0_i32_0 : i32, i32
  }
  func.func @transform_9(%arg0: i32) -> (i32, i32) {
    %c0_i32 = arith.constant 0 : i32
    %c0_i32_0 = arith.constant 0 : i32
    %c0_i32_1 = arith.constant 0 : i32
    return %c0_i32, %c0_i32_0 : i32, i32
  }
  func.func @transform_10(%arg0: i32) -> (i32, i32) {
    %c0_i32 = arith.constant 0 : i32
    %c0_i32_0 = arith.constant 0 : i32
    %c0_i32_1 = arith.constant 0 : i32
    return %c0_i32, %c0_i32_0 : i32, i32
  }
  func.func @transform_11(%arg0: i32) -> (i32, i32) {
    %c0_i32 = arith.constant 0 : i32
    %c0_i32_0 = arith.constant 0 : i32
    %c0_i32_1 = arith.constant 0 : i32
    return %c0_i32, %c0_i32_0 : i32, i32
  }
  func.func @transform_12(%arg0: i32) -> (i32, i32) {
    %c0_i32 = arith.constant 0 : i32
    %c0_i32_0 = arith.constant 0 : i32
    return %arg0, %c0_i32 : i32, i32
  }
}

</mosaic_0001>

<llo_original>
// kernel: tpu_custom_call.1
$region0: #{tpu_custom_call.1}
  #allocation0 [shape = 'u32[]', space=smem, size = 0x4, offset = 0x4, fixed_abs, tag = 'smem constant byte address 0x4 - core index']
  #allocation1 [shape = 'u32[144,128]{1,0:T(1,128)}', space=vmem, size = 0x12000, scoped, tag = 'internal scratch']
  %s0 = inlined_call_operand.vmem [shape: f32[16,32], index: 0, kind: input, shape index: {}]
  %s1 = inlined_call_operand.vmem [shape: f32[32,96], index: 1, kind: input, shape index: {}]
  %s2 = inlined_call_operand.vmem [shape: f32[1,96], index: 2, kind: input, shape index: {}]
  %s3 = inlined_call_operand.vmem [shape: f32[256,32], index: 3, kind: input, shape index: {}]
  %s4 = inlined_call_operand.vmem [shape: f32[32,256], index: 4, kind: input, shape index: {}]
  %s5 = inlined_call_operand.vmem [shape: f32[256,32], index: 5, kind: input, shape index: {}]
  %s6 = inlined_call_operand.vmem [shape: f32[1,32], index: 6, kind: input, shape index: {}]
  %s7 = inlined_call_operand.vmem [shape: f32[2,32], index: 7, kind: input, shape index: {}]
  %s8 = inlined_call_operand.vmem [shape: f32[32,128], index: 8, kind: input, shape index: {}]
  %s9 = inlined_call_operand.vmem [shape: f32[1,128], index: 9, kind: input, shape index: {}]
  %s10 = inlined_call_operand.vmem [shape: f32[128,32], index: 10, kind: input, shape index: {}]
  %s11 = inlined_call_operand.vmem [shape: f32[1,32], index: 11, kind: input, shape index: {}]
  %s12 = inlined_call_operand.hbm [shape: f32[16,32], index: 12, kind: output, shape index: {}]
  %s13 = sld [smem:[#allocation0]]
  $region58: #{tpu_custom_call.1} parent=0
    _
  %s15 = ssub.s32 1, %s13
  %s16 = scalar_select 0, %s15, %s13
  $region1: #{tpu_custom_call.1} parent=0
    #allocation2 [shape = 'u8[8192]{0}', space=vmem, size = 0x2000, scoped, tag = 'output window, operand 0, single buffered']
    #allocation3 [shape = 's32[1]{0}', space=sflag, size = 0x4, scoped, tag = 'scoped memory for tpu_custom_call.1']
    %17 = vsyncpa [#allocation3], 0
    // Predicated region
    $region2: #{tpu_custom_call.1} parent=1 // pred_check
      _
    $region3: #{tpu_custom_call.1} parent=1 // pred_check_branch
      %19 = sbr.rel (0) target = $region5
    $region4: #{tpu_custom_call.1} parent=1 // pred_region
      _
    $region5: #{tpu_custom_call.1} parent=1 // pred_fallthru
      _
    // Predicated region
    $region6: #{tpu_custom_call.1} parent=1 // pred_check
      _
    $region7: #{tpu_custom_call.1} parent=1 // pred_check_branch
      %21 = sbr.rel (0) target = $region9
    $region8: #{tpu_custom_call.1} parent=1 // pred_region
      _
    $region9: #{tpu_custom_call.1} parent=1 // pred_fallthru
      _
    // Predicated region
    $region10: #{tpu_custom_call.1} parent=1 // pred_check
      _
    $region11: #{tpu_custom_call.1} parent=1 // pred_check_branch
      %23 = sbr.rel (0) target = $region13
    $region12: #{tpu_custom_call.1} parent=1 // pred_region
      _
    $region13: #{tpu_custom_call.1} parent=1 // pred_fallthru
      _
    // Predicated region
    $region14: #{tpu_custom_call.1} parent=1 // pred_check
      _
    $region15: #{tpu_custom_call.1} parent=1 // pred_check_branch
      %25 = sbr.rel (0) target = $region17
    $region16: #{tpu_custom_call.1} parent=1 // pred_region
      _
    $region17: #{tpu_custom_call.1} parent=1 // pred_fallthru
      _
    // Predicated region
    $region18: #{tpu_custom_call.1} parent=1 // pred_check
      _
    $region19: #{tpu_custom_call.1} parent=1 // pred_check_branch
      %27 = sbr.rel (0) target = $region21
    $region20: #{tpu_custom_call.1} parent=1 // pred_region
      _
    $region21: #{tpu_custom_call.1} parent=1 // pred_fallthru
      _
    // Predicated region
    $region22: #{tpu_custom_call.1} parent=1 // pred_check
      _
    $region23: #{tpu_custom_call.1} parent=1 // pred_check_branch
      %29 = sbr.rel (0) target = $region25
    $region24: #{tpu_custom_call.1} parent=1 // pred_region
      _
    $region25: #{tpu_custom_call.1} parent=1 // pred_fallthru
      _
    // Predicated region
    $region26: #{tpu_custom_call.1} parent=1 // pred_check
      _
    $region27: #{tpu_custom_call.1} parent=1 // pred_check_branch
      %31 = sbr.rel (0) target = $region29
    $region28: #{tpu_custom_call.1} parent=1 // pred_region
      _
    $region29: #{tpu_custom_call.1} parent=1 // pred_fallthru
      _
    // Predicated region
    $region30: #{tpu_custom_call.1} parent=1 // pred_check
      _
    $region31: #{tpu_custom_call.1} parent=1 // pred_check_branch
      %33 = sbr.rel (0) target = $region33
    $region32: #{tpu_custom_call.1} parent=1 // pred_region
      _
    $region33: #{tpu_custom_call.1} parent=1 // pred_fallthru
      _
    // Predicated region
    $region34: #{tpu_custom_call.1} parent=1 // pred_check
      _
    $region35: #{tpu_custom_call.1} parent=1 // pred_check_branch
      %35 = sbr.rel (0) target = $region37
    $region36: #{tpu_custom_call.1} parent=1 // pred_region
      _
    $region37: #{tpu_custom_call.1} parent=1 // pred_fallthru
      _
    // Predicated region
    $region38: #{tpu_custom_call.1} parent=1 // pred_check
      _
    $region39: #{tpu_custom_call.1} parent=1 // pred_check_branch
      %37 = sbr.rel (0) target = $region41
    $region40: #{tpu_custom_call.1} parent=1 // pred_region
      _
    $region41: #{tpu_custom_call.1} parent=1 // pred_fallthru
      _
    // Predicated region
    $region42: #{tpu_custom_call.1} parent=1 // pred_check
      _
    $region43: #{tpu_custom_call.1} parent=1 // pred_check_branch
      %39 = sbr.rel (0) target = $region45
    $region44: #{tpu_custom_call.1} parent=1 // pred_region
      _
    $region45: #{tpu_custom_call.1} parent=1 // pred_fallthru
      _
    // Predicated region
    $region46: #{tpu_custom_call.1} parent=1 // pred_check
      _
    $region47: #{tpu_custom_call.1} parent=1 // pred_check_branch
      %41 = sbr.rel (0) target = $region49
    $region48: #{tpu_custom_call.1} parent=1 // pred_region
      _
    $region49: #{tpu_custom_call.1} parent=1 // pred_fallthru
      _
    %v42 = vld [vmem:[%s0] sm:$0xff]
    %v43 = vld [vmem:[%s0 + $0x8] sm:$0xff]
    %v44 = vld [vmem:[%s7] sm:$0x3]
    %vm45 = vcmask 261120
    %v46 = vsel %vm45, %v42, 0.0
    %47 = vadd.xlane.f32.xlu0 %v46
    %v48 = vpop.xlane.xlu0 %47
    %v49 = vsel %vm45, %v43, 0.0
    %50 = vadd.xlane.f32.xlu0 %v49
    %v51 = vpop.xlane.xlu0 %50
    %v52 = vrcp.pop 32.0
    %v53 = vmul.f32 %v48, %v52
    %v54 = vmul.f32 %v51, %v52
    %v55 = vsub.f32 %v42, %v53
    %v56 = vsub.f32 %v43, %v54
    %v57 = vmul.f32 %v55, %v55
    %v58 = vmul.f32 %v56, %v56
    %v59 = vsel %vm45, %v57, 0.0
    %60 = vadd.xlane.f32.xlu0 %v59
    %v61 = vpop.xlane.xlu0 %60
    %v62 = vsel %vm45, %v58, 0.0
    %63 = vadd.xlane.f32.xlu0 %v62
    %v64 = vpop.xlane.xlu0 %63
    %v65 = vmul.f32 %v61, %v52
    %v66 = vmul.f32 %v64, %v52
    %v67 = vadd.f32 %v65, 1e-05
    %v68 = vadd.f32 %v66, 1e-05
    %v69 = vrsqrt.pop %v67
    %v70 = vrsqrt.pop %v68
    %v71 = vmul.f32 %v55, %v69
    %v72 = vmul.f32 %v56, %v70
    %v73 = vlaneseq
    %v74 = vshrl.u32 %v73, 7
    %v75 = vsub.s32 0, %v74
    %v76 = vrot.slane %v44, %v75
    %v77 = vmul.f32 %v71, %v76
    %v78 = vmul.f32 %v72, %v76
    %v79 = vlaneseq
    %v80 = vshrl.u32 %v79, 7
    %v81 = vsub.s32 1, %v80
    %v82 = vrot.slane %v44, %v81
    %v83 = vadd.f32 %v77, %v82
    %v84 = vadd.f32 %v78, %v82
    %v85 = vld [vmem:[%s1] sm:$0xff]
    %v86 = vld [vmem:[%s1 + $0x8] sm:$0xff]
    %v87 = vld [vmem:[%s1 + $0x10] sm:$0xff]
    %v88 = vld [vmem:[%s1 + $0x18] sm:$0xff]
    %v89 = vld [vmem:[%s2] sm:$0x1]
    %v91 = vlaneseq
    %v92 = vshrl.u32 %v91, 7
    %v93 = vsub.s32 0, %v92
    %v94 = vrot.slane %v89, %v93
    %v97 = vsel %vm45, %v83, 0
    %v100 = vsel %vm45, %v84, 0
    %102 = vmatprep.subr.mxu0 0.0
    %103 = vmatpush1.msra.mxu0 0.0
    %104 = vmatprep.subr.mxu0 0.0
    %105 = vmatpush1.msra.mxu0 0.0
    %106 = vmatprep.subr.mxu0 0.0
    %107 = vmatpush1.msra.mxu0 0.0
    %108 = vmatprep.subr.mxu0 0.0
    %109 = vmatpush1.msra.mxu0 0.0
    %110 = vmatprep.subr.mxu0 0.0
    %111 = vmatpush1.msra.mxu0 0.0
    %112 = vmatprep.subr.mxu0 0.0
    %113 = vmatpush1.msra.mxu0 0.0
    %114 = vmatprep.subr.mxu0 0.0
    %115 = vmatpush1.msra.mxu0 0.0
    %116 = vmatprep.subr.mxu0 0.0
    %117 = vmatpush1.msra.mxu0 0.0
    %118 = vmatprep.subr.mxu0 0.0
    %119 = vmatpush1.msra.mxu0 0.0
    %120 = vmatprep.subr.mxu0 0.0
    %121 = vmatpush1.msra.mxu0 0.0
    %122 = vmatprep.subr.mxu0 0.0
    %123 = vmatpush1.msra.mxu0 0.0
    %124 = vmatprep.subr.mxu0 0.0
    %125 = vmatpush1.msra.mxu0 0.0
    %126 = vmatprep.subr.mxu0 0.0
    %127 = vmatpush1.msra.mxu0 %v88
    %128 = vmatprep.subr.mxu0 0.0
    %129 = vmatpush1.msra.mxu0 %v87
    %130 = vmatprep.subr.mxu0 0.0
    %131 = vmatpush1.msra.mxu0 %v86
    %132 = vmatprep.subr.mxu0 0.0
    %133 = vmatpush1.msra.mxu0 %v85
    %134 = vmatprep.subr.mxu0 0.0
    %135 = vmatpush2.msra.mxu0 0.0
    %136 = vmatprep.subr.mxu0 0.0
    %137 = vmatpush2.msra.mxu0 0.0
    %138 = vmatprep.subr.mxu0 0.0
    %139 = vmatpush2.msra.mxu0 0.0
    %140 = vmatprep.subr.mxu0 0.0
    %141 = vmatpush2.msra.mxu0 0.0
    %142 = vmatprep.subr.mxu0 0.0
    %143 = vmatpush2.msra.mxu0 0.0
    %144 = vmatprep.subr.mxu0 0.0
    %145 = vmatpush2.msra.mxu0 0.0
    %146 = vmatprep.subr.mxu0 0.0
    %147 = vmatpush2.msra.mxu0 0.0
    %148 = vmatprep.subr.mxu0 0.0
    %149 = vmatpush2.msra.mxu0 0.0
    %150 = vmatprep.subr.mxu0 0.0
    %151 = vmatpush2.msra.mxu0 0.0
    %152 = vmatprep.subr.mxu0 0.0
    %153 = vmatpush2.msra.mxu0 0.0
    %154 = vmatprep.subr.mxu0 0.0
    %155 = vmatpush2.msra.mxu0 0.0
    %156 = vmatprep.subr.mxu0 0.0
    %157 = vmatpush2.msra.mxu0 0.0
    %158 = vmatprep.subr.mxu0 0.0
    %159 = vmatpush2.msra.mxu0 0.0
    %160 = vmatprep.subr.mxu0 0.0
    %161 = vmatpush2.msra.mxu0 0.0
    %162 = vmatprep.subr.mxu0 0.0
    %163 = vmatpush2.msra.mxu0 0.0
    %164 = vmatprep.subr.mxu0 0.0
    %165 = vmatpush2.msra.mxu0 0.0
    %166 = vmatprep.mubr.f32.mxu0 0.0
    %167 = vmatmul.mubr.f32.gmra.mxu0 %v97
    %v168 = vpop.f32.mrf.mxu0
    %v169 = vadd.f32 %v94, %v168
    %v170 = vpop.f32.mrf.mxu0
    %171 = vmatprep.mubr.f32.mxu0 0.0
    %172 = vmatmul.mubr.f32.gmra.mxu0 %v100
    %v173 = vpop.f32.mrf.mxu0
    %v174 = vadd.f32 %v94, %v173
    %v175 = vpop.f32.mrf.mxu0
    %176 = vdwg.mxu0
    %v177 = vlaneseq
    %v178 = vshrl.u32 %v177, 7
    %v179 = vsub.s32 0, %v178
    %v180 = vrot.slane %v169, %v179
    %v181 = vlaneseq
    %v182 = vshrl.u32 %v181, 7
    %v183 = vsub.s32 0, %v182
    %v184 = vrot.slane %v174, %v183
    %187 = vrot.lane.b32.xlu0 %v180, 96
    %v188 = vpop.permute.xlu0 %187
    %189 = vrot.lane.b32.xlu0 %v184, 96
    %v190 = vpop.permute.xlu0 %189
    %v193 = vmul.f32 %v169, %v188
    %v194 = vmul.f32 %v174, %v190
    %v195 = vlaneseq
    %v196 = vshrl.u32 %v195, 7
    %v197 = vsub.s32 1, %v196
    %v198 = vrot.slane %v169, %v197
    %v199 = vlaneseq
    %v200 = vshrl.u32 %v199, 7
    %v201 = vsub.s32 1, %v200
    %v202 = vrot.slane %v174, %v201
    %205 = vrot.lane.b32.xlu0 %v198, 96
    %v206 = vpop.permute.xlu0 %205
    %207 = vrot.lane.b32.xlu0 %v202, 96
    %v208 = vpop.permute.xlu0 %207
    %v211 = vmul.f32 %v169, %v206
    %v212 = vmul.f32 %v174, %v208
    %v213 = vlaneseq
    %v214 = vshrl.u32 %v213, 7
    %v215 = vsub.s32 2, %v214
    %v216 = vrot.slane %v169, %v215
    %v217 = vlaneseq
    %v218 = vshrl.u32 %v217, 7
    %v219 = vsub.s32 2, %v218
    %v220 = vrot.slane %v174, %v219
    %223 = vrot.lane.b32.xlu0 %v216, 96
    %v224 = vpop.permute.xlu0 %223
    %225 = vrot.lane.b32.xlu0 %v220, 96
    %v226 = vpop.permute.xlu0 %225
    %v229 = vmul.f32 %v169, %v224
    %v230 = vmul.f32 %v174, %v226
    %v231 = vlaneseq
    %v232 = vshrl.u32 %v231, 7
    %v233 = vsub.s32 3, %v232
    %v234 = vrot.slane %v169, %v233
    %v235 = vlaneseq
    %v236 = vshrl.u32 %v235, 7
    %v237 = vsub.s32 3, %v236
    %v238 = vrot.slane %v174, %v237
    %241 = vrot.lane.b32.xlu0 %v234, 96
    %v242 = vpop.permute.xlu0 %241
    %243 = vrot.lane.b32.xlu0 %v238, 96
    %v244 = vpop.permute.xlu0 %243
    %v247 = vmul.f32 %v169, %v242
    %v248 = vmul.f32 %v174, %v244
    %v249 = vlaneseq
    %v250 = vshrl.u32 %v249, 7
    %v251 = vsub.s32 4, %v250
    %v252 = vrot.slane %v169, %v251
    %v253 = vlaneseq
    %v254 = vshrl.u32 %v253, 7
    %v255 = vsub.s32 4, %v254
    %v256 = vrot.slane %v174, %v255
    %259 = vrot.lane.b32.xlu0 %v252, 96
    %v260 = vpop.permute.xlu0 %259
    %261 = vrot.lane.b32.xlu0 %v256, 96
    %v262 = vpop.permute.xlu0 %261
    %v265 = vmul.f32 %v169, %v260
    %v266 = vmul.f32 %v174, %v262
    %v267 = vlaneseq
    %v268 = vshrl.u32 %v267, 7
    %v269 = vsub.s32 5, %v268
    %v270 = vrot.slane %v169, %v269
    %v271 = vlaneseq
    %v272 = vshrl.u32 %v271, 7
    %v273 = vsub.s32 5, %v272
    %v274 = vrot.slane %v174, %v273
    %277 = vrot.lane.b32.xlu0 %v270, 96
    %v278 = vpop.permute.xlu0 %277
    %279 = vrot.lane.b32.xlu0 %v274, 96
    %v280 = vpop.permute.xlu0 %279
    %v283 = vmul.f32 %v169, %v278
    %v284 = vmul.f32 %v174, %v280
    %v285 = vlaneseq
    %v286 = vshrl.u32 %v285, 7
    %v287 = vsub.s32 6, %v286
    %v288 = vrot.slane %v169, %v287
    %v289 = vlaneseq
    %v290 = vshrl.u32 %v289, 7
    %v291 = vsub.s32 6, %v290
    %v292 = vrot.slane %v174, %v291
    %295 = vrot.lane.b32.xlu0 %v288, 96
    %v296 = vpop.permute.xlu0 %295
    %297 = vrot.lane.b32.xlu0 %v292, 96
    %v298 = vpop.permute.xlu0 %297
    %v301 = vmul.f32 %v169, %v296
    %v302 = vmul.f32 %v174, %v298
    %v303 = vlaneseq
    %v304 = vshrl.u32 %v303, 7
    %v305 = vsub.s32 7, %v304
    %v306 = vrot.slane %v169, %v305
    %v307 = vlaneseq
    %v308 = vshrl.u32 %v307, 7
    %v309 = vsub.s32 7, %v308
    %v310 = vrot.slane %v174, %v309
    %313 = vrot.lane.b32.xlu0 %v306, 96
    %v314 = vpop.permute.xlu0 %313
    %315 = vrot.lane.b32.xlu0 %v310, 96
    %v316 = vpop.permute.xlu0 %315
    %v319 = vmul.f32 %v169, %v314
    %v320 = vmul.f32 %v174, %v316
    %323 = vrot.lane.b32.xlu0 %v211, 32
    %v324 = vpop.permute.xlu0 %323
    %325 = vrot.lane.b32.xlu0 %v212, 32
    %v326 = vpop.permute.xlu0 %325
    %331 = vrot.lane.b32.xlu0 %v229, 64
    %v332 = vpop.permute.xlu0 %331
    %333 = vrot.lane.b32.xlu0 %v230, 64
    %v334 = vpop.permute.xlu0 %333
    %339 = vrot.lane.b32.xlu0 %v247, 96
    %v340 = vpop.permute.xlu0 %339
    %341 = vrot.lane.b32.xlu0 %v248, 96
    %v342 = vpop.permute.xlu0 %341
    %347 = vrot.lane.b32.xlu0 %v283, 32
    %v348 = vpop.permute.xlu0 %347
    %349 = vrot.lane.b32.xlu0 %v284, 32
    %v350 = vpop.permute.xlu0 %349
    %355 = vrot.lane.b32.xlu0 %v301, 64
    %v356 = vpop.permute.xlu0 %355
    %357 = vrot.lane.b32.xlu0 %v302, 64
    %v358 = vpop.permute.xlu0 %357
    %363 = vrot.lane.b32.xlu0 %v319, 96
    %v364 = vpop.permute.xlu0 %363
    %365 = vrot.lane.b32.xlu0 %v320, 96
    %v366 = vpop.permute.xlu0 %365
    %v369 = vsel %vm45, %v193, %v324
    %v370 = vsel %vm45, %v194, %v326
    %vm371 = vcmask 523264
    %v372 = vsel %vm371, %v369, %v332
    %v373 = vsel %vm371, %v370, %v334
    %vm374 = vcmask 785408
    %v375 = vsel %vm374, %v372, %v340
    %v376 = vsel %vm374, %v373, %v342
    %v377 = vsel %vm45, %v265, %v348
    %v378 = vsel %vm45, %v266, %v350
    %v379 = vsel %vm371, %v377, %v356
    %v380 = vsel %vm371, %v378, %v358
    %v381 = vsel %vm374, %v379, %v364
    %v382 = vsel %vm374, %v380, %v366
    %383 = vrot.lane.b32.xlu0 %v180, 64
    %v384 = vpop.permute.xlu0 %383
    %385 = vrot.lane.b32.xlu0 %v184, 64
    %v386 = vpop.permute.xlu0 %385
    %389 = vrot.lane.b32.xlu0 %v234, 32
    %v390 = vpop.permute.xlu0 %389
    %391 = vrot.lane.b32.xlu0 %v238, 32
    %v392 = vpop.permute.xlu0 %391
    %395 = vrot.lane.b32.xlu0 %v252, 64
    %v396 = vpop.permute.xlu0 %395
    %397 = vrot.lane.b32.xlu0 %v256, 64
    %v398 = vpop.permute.xlu0 %397
    %401 = vrot.lane.b32.xlu0 %v306, 32
    %v402 = vpop.permute.xlu0 %401
    %403 = vrot.lane.b32.xlu0 %v310, 32
    %v404 = vpop.permute.xlu0 %403
    %v407 = vsel %vm45, %v384, %v206
    %v408 = vsel %vm45, %v386, %v208
    %v409 = vsel %vm371, %v407, %v216
    %v410 = vsel %vm371, %v408, %v220
    %v411 = vsel %vm374, %v409, %v390
    %v412 = vsel %vm374, %v410, %v392
    %v413 = vsel %vm45, %v396, %v278
    %v414 = vsel %vm45, %v398, %v280
    %v415 = vsel %vm371, %v413, %v288
    %v416 = vsel %vm371, %v414, %v292
    %v417 = vsel %vm374, %v415, %v402
    %v418 = vsel %vm374, %v416, %v404
    %v419 = vld [vmem:[%s3] sm:$0xff]
    %v420 = vld [vmem:[%s3 + $0x8] sm:$0xff]
    %v421 = vld [vmem:[%s3 + $0x10] sm:$0xff]
    %v422 = vld [vmem:[%s3 + $0x18] sm:$0xff]
    %v423 = vld [vmem:[%s3 + $0x20] sm:$0xff]
    %v424 = vld [vmem:[%s3 + $0x28] sm:$0xff]
    %v425 = vld [vmem:[%s3 + $0x30] sm:$0xff]
    %v426 = vld [vmem:[%s3 + $0x38] sm:$0xff]
    %v427 = vld [vmem:[%s3 + $0x40] sm:$0xff]
    %v428 = vld [vmem:[%s3 + $0x48] sm:$0xff]
    %v429 = vld [vmem:[%s3 + $0x50] sm:$0xff]
    %v430 = vld [vmem:[%s3 + $0x58] sm:$0xff]
    %v431 = vld [vmem:[%s3 + $0x60] sm:$0xff]
    %v432 = vld [vmem:[%s3 + $0x68] sm:$0xff]
    %v433 = vld [vmem:[%s3 + $0x70] sm:$0xff]
    %v434 = vld [vmem:[%s3 + $0x78] sm:$0xff]
    %v435 = vld [vmem:[%s3 + $0x80] sm:$0xff]
    %v436 = vld [vmem:[%s3 + $0x88] sm:$0xff]
    %v437 = vld [vmem:[%s3 + $0x90] sm:$0xff]
    %v438 = vld [vmem:[%s3 + $0x98] sm:$0xff]
    %v439 = vld [vmem:[%s3 + $0xa0] sm:$0xff]
    %v440 = vld [vmem:[%s3 + $0xa8] sm:$0xff]
    %v441 = vld [vmem:[%s3 + $0xb0] sm:$0xff]
    %v442 = vld [vmem:[%s3 + $0xb8] sm:$0xff]
    %v443 = vld [vmem:[%s3 + $0xc0] sm:$0xff]
    %v444 = vld [vmem:[%s3 + $0xc8] sm:$0xff]
    %v445 = vld [vmem:[%s3 + $0xd0] sm:$0xff]
    %v446 = vld [vmem:[%s3 + $0xd8] sm:$0xff]
    %v447 = vld [vmem:[%s3 + $0xe0] sm:$0xff]
    %v448 = vld [vmem:[%s3 + $0xe8] sm:$0xff]
    %v449 = vld [vmem:[%s3 + $0xf0] sm:$0xff]
    %v450 = vld [vmem:[%s3 + $0xf8] sm:$0xff]
    %451 = vmatprep.subr.mxu0 0.0
    %452 = vmatpush1.msra.mxu0 %v434
    %453 = vmatprep.subr.mxu0 0.0
    %454 = vmatpush1.msra.mxu0 %v433
    %455 = vmatprep.subr.mxu0 0.0
    %456 = vmatpush1.msra.mxu0 %v432
    %457 = vmatprep.subr.mxu0 0.0
    %458 = vmatpush1.msra.mxu0 %v431
    %459 = vmatprep.subr.mxu0 0.0
    %460 = vmatpush1.msra.mxu0 %v430
    %461 = vmatprep.subr.mxu0 0.0
    %462 = vmatpush1.msra.mxu0 %v429
    %463 = vmatprep.subr.mxu0 0.0
    %464 = vmatpush1.msra.mxu0 %v428
    %465 = vmatprep.subr.mxu0 0.0
    %466 = vmatpush1.msra.mxu0 %v427
    %467 = vmatprep.subr.mxu0 0.0
    %468 = vmatpush1.msra.mxu0 %v426
    %469 = vmatprep.subr.mxu0 0.0
    %470 = vmatpush1.msra.mxu0 %v425
    %471 = vmatprep.subr.mxu0 0.0
    %472 = vmatpush1.msra.mxu0 %v424
    %473 = vmatprep.subr.mxu0 0.0
    %474 = vmatpush1.msra.mxu0 %v423
    %475 = vmatprep.subr.mxu0 0.0
    %476 = vmatpush1.msra.mxu0 %v422
    %477 = vmatprep.subr.mxu0 0.0
    %478 = vmatpush1.msra.mxu0 %v421
    %479 = vmatprep.subr.mxu0 0.0
    %480 = vmatpush1.msra.mxu0 %v420
    %481 = vmatprep.subr.mxu0 0.0
    %482 = vmatpush1.msra.mxu0 %v419
    %483 = vmatprep.subr.mxu0 0.0
    %484 = vmatpush2.msra.mxu0 %v450
    %485 = vmatprep.subr.mxu0 0.0
    %486 = vmatpush2.msra.mxu0 %v449
    %487 = vmatprep.subr.mxu0 0.0
    %488 = vmatpush2.msra.mxu0 %v448
    %489 = vmatprep.subr.mxu0 0.0
    %490 = vmatpush2.msra.mxu0 %v447
    %491 = vmatprep.subr.mxu0 0.0
    %492 = vmatpush2.msra.mxu0 %v446
    %493 = vmatprep.subr.mxu0 0.0
    %494 = vmatpush2.msra.mxu0 %v445
    %495 = vmatprep.subr.mxu0 0.0
    %496 = vmatpush2.msra.mxu0 %v444
    %497 = vmatprep.subr.mxu0 0.0
    %498 = vmatpush2.msra.mxu0 %v443
    %499 = vmatprep.subr.mxu0 0.0
    %500 = vmatpush2.msra.mxu0 %v442
    %501 = vmatprep.subr.mxu0 0.0
    %502 = vmatpush2.msra.mxu0 %v441
    %503 = vmatprep.subr.mxu0 0.0
    %504 = vmatpush2.msra.mxu0 %v440
    %505 = vmatprep.subr.mxu0 0.0
    %506 = vmatpush2.msra.mxu0 %v439
    %507 = vmatprep.subr.mxu0 0.0
    %508 = vmatpush2.msra.mxu0 %v438
    %509 = vmatprep.subr.mxu0 0.0
    %510 = vmatpush2.msra.mxu0 %v437
    %511 = vmatprep.subr.mxu0 0.0
    %512 = vmatpush2.msra.mxu0 %v436
    %513 = vmatprep.subr.mxu0 0.0
    %514 = vmatpush2.msra.mxu0 %v435
    %515 = vmatprep.mubr.f32.mxu0 %v381
    %516 = vmatmul.mubr.f32.gmra.mxu0 %v375
    %v517 = vpop.f32.mrf.mxu0
    %v518 = vadd.f32 0.0, %v517
    %v519 = vpop.f32.mrf.mxu0
    %520 = vmatprep.mubr.f32.mxu0 %v382
    %521 = vmatmul.mubr.f32.gmra.mxu0 %v376
    %v522 = vpop.f32.mrf.mxu0
    %v523 = vadd.f32 0.0, %v522
    %v524 = vpop.f32.mrf.mxu0
    %525 = vdwg.mxu0
    %v526 = vlaneseq
    %v527 = vshrl.u32 %v526, 7
    %v528 = vlaneseq
    %v529 = vand.u32 %v528, 127
    %vm530 = vcmp.lt.s32.totalorder %v529, 0
    %v531 = vsub.s32 0, %v529
    %v532 = vsel %vm530, %v531, %v529
    %v533 = vshrl.u32 %v532, 3
    %v534 = vand.u32 %v532, 7
    %v535 = vsub.s32 0, %v534
    %v536 = vsel %vm530, %v535, %v534
    %vm537 = vcmp.ne.s32.totalorder %v536, 0
    %vm538 = vcmp.lt.s32.totalorder %v536, 0
    %vm539 = vmand %vm538, %vm537
    %v540 = vadd.s32 %v536, 8
    %v541 = vsel %vm539, %v540, %v536
    %vm542 = vcmp.le.s32.totalorder %v541, %v527
    %v543 = vsel %vm542, 1, 0
    %vm544 = vcmp.eq.s32.totalorder %v543, 1
    %v545 = vsel %vm544, %v518, 0.0
    %v546 = vsel %vm544, %v523, 0.0
    %549 = vrot.lane.b32.xlu0 %v545, 120
    %v550 = vpop.permute.xlu0 %549
    %551 = vrot.lane.b32.xlu0 %v546, 120
    %v552 = vpop.permute.xlu0 %551
    %v555 = vmax.f32 %v545, %v550
    %v556 = vmax.f32 %v546, %v552
    %557 = vrot.lane.b32.xlu0 %v545, 112
    %v558 = vpop.permute.xlu0 %557
    %559 = vrot.lane.b32.xlu0 %v546, 112
    %v560 = vpop.permute.xlu0 %559
    %v563 = vmax.f32 %v555, %v558
    %v564 = vmax.f32 %v556, %v560
    %565 = vrot.lane.b32.xlu0 %v545, 104
    %v566 = vpop.permute.xlu0 %565
    %567 = vrot.lane.b32.xlu0 %v546, 104
    %v568 = vpop.permute.xlu0 %567
    %v571 = vmax.f32 %v563, %v566
    %v572 = vmax.f32 %v564, %v568
    %v573 = vsub.f32 %v545, %v571
    %v574 = vsub.f32 %v546, %v572
    %v575 = vmul.f32 %v573, 1.442695
    %v576 = vpow.pop %v575
    %v577 = vmul.f32 %v574, 1.442695
    %v578 = vpow.pop %v577
    %581 = vrot.lane.b32.xlu0 %v571, 8
    %v582 = vpop.permute.xlu0 %581
    %583 = vrot.lane.b32.xlu0 %v572, 8
    %v584 = vpop.permute.xlu0 %583
    %v587 = vsub.f32 %v545, %v582
    %v588 = vsub.f32 %v546, %v584
    %v589 = vmul.f32 %v587, 1.442695
    %v590 = vpow.pop %v589
    %v591 = vmul.f32 %v588, 1.442695
    %v592 = vpow.pop %v591
    %593 = vrot.lane.b32.xlu0 %v571, 16
    %v594 = vpop.permute.xlu0 %593
    %595 = vrot.lane.b32.xlu0 %v572, 16
    %v596 = vpop.permute.xlu0 %595
    %v599 = vsub.f32 %v545, %v594
    %v600 = vsub.f32 %v546, %v596
    %v601 = vmul.f32 %v599, 1.442695
    %v602 = vpow.pop %v601
    %v603 = vmul.f32 %v600, 1.442695
    %v604 = vpow.pop %v603
    %605 = vrot.lane.b32.xlu0 %v571, 24
    %v606 = vpop.permute.xlu0 %605
    %607 = vrot.lane.b32.xlu0 %v572, 24
    %v608 = vpop.permute.xlu0 %607
    %v611 = vsub.f32 %v545, %v606
    %v612 = vsub.f32 %v546, %v608
    %v613 = vmul.f32 %v611, 1.442695
    %v614 = vpow.pop %v613
    %v615 = vmul.f32 %v612, 1.442695
    %v616 = vpow.pop %v615
    %619 = vrot.lane.b32.xlu0 %v590, 120
    %v620 = vpop.permute.xlu0 %619
    %621 = vrot.lane.b32.xlu0 %v592, 120
    %v622 = vpop.permute.xlu0 %621
    %v625 = vadd.f32 %v576, %v620
    %v626 = vadd.f32 %v578, %v622
    %629 = vrot.lane.b32.xlu0 %v602, 112
    %v630 = vpop.permute.xlu0 %629
    %631 = vrot.lane.b32.xlu0 %v604, 112
    %v632 = vpop.permute.xlu0 %631
    %v635 = vadd.f32 %v625, %v630
    %v636 = vadd.f32 %v626, %v632
    %639 = vrot.lane.b32.xlu0 %v614, 104
    %v640 = vpop.permute.xlu0 %639
    %641 = vrot.lane.b32.xlu0 %v616, 104
    %v642 = vpop.permute.xlu0 %641
    %v645 = vadd.f32 %v635, %v640
    %v646 = vadd.f32 %v636, %v642
    %v647 = vrcp.pop %v645
    %v648 = vrcp.pop %v646
    %v649 = vmul.f32 %v576, %v647
    %v650 = vmul.f32 %v578, %v648
    %653 = vrot.lane.b32.xlu0 %v647, 8
    %v654 = vpop.permute.xlu0 %653
    %655 = vrot.lane.b32.xlu0 %v648, 8
    %v656 = vpop.permute.xlu0 %655
    %v659 = vmul.f32 %v590, %v654
    %v660 = vmul.f32 %v592, %v656
    %661 = vrot.lane.b32.xlu0 %v647, 16
    %v662 = vpop.permute.xlu0 %661
    %663 = vrot.lane.b32.xlu0 %v648, 16
    %v664 = vpop.permute.xlu0 %663
    %v667 = vmul.f32 %v602, %v662
    %v668 = vmul.f32 %v604, %v664
    %669 = vrot.lane.b32.xlu0 %v647, 24
    %v670 = vpop.permute.xlu0 %669
    %671 = vrot.lane.b32.xlu0 %v648, 24
    %v672 = vpop.permute.xlu0 %671
    %v675 = vmul.f32 %v614, %v670
    %v676 = vmul.f32 %v616, %v672
    %vm677 = vcmask 64512
    %v678 = vsel %vm677, %v649, %v659
    %v679 = vsel %vm677, %v650, %v660
    %vm680 = vcmask 130048
    %v681 = vsel %vm680, %v678, %v667
    %v682 = vsel %vm680, %v679, %v668
    %vm683 = vcmask 195584
    %v684 = vsel %vm683, %v681, %v675
    %v685 = vsel %vm683, %v682, %v676
    %v686 = vld [vmem:[%s4] sm:$0xff]
    %v687 = vld [vmem:[%s4 + $0x8] sm:$0xff]
    %v688 = vld [vmem:[%s4 + $0x10] sm:$0xff]
    %v689 = vld [vmem:[%s4 + $0x18] sm:$0xff]
    %v690 = vld [vmem:[%s4 + $0x20] sm:$0xff]
    %v691 = vld [vmem:[%s4 + $0x28] sm:$0xff]
    %v692 = vld [vmem:[%s4 + $0x30] sm:$0xff]
    %v693 = vld [vmem:[%s4 + $0x38] sm:$0xff]
    %v695 = vsel %vm45, %v684, 0
    %v698 = vsel %vm45, %v685, 0
    %700 = vmatprep.subr.mxu0 0.0
    %701 = vmatpush1.msra.mxu0 0.0
    %702 = vmatprep.subr.mxu0 0.0
    %703 = vmatpush1.msra.mxu0 0.0
    %704 = vmatprep.subr.mxu0 0.0
    %705 = vmatpush1.msra.mxu0 0.0
    %706 = vmatprep.subr.mxu0 0.0
    %707 = vmatpush1.msra.mxu0 0.0
    %708 = vmatprep.subr.mxu0 0.0
    %709 = vmatpush1.msra.mxu0 0.0
    %710 = vmatprep.subr.mxu0 0.0
    %711 = vmatpush1.msra.mxu0 0.0
    %712 = vmatprep.subr.mxu0 0.0
    %713 = vmatpush1.msra.mxu0 0.0
    %714 = vmatprep.subr.mxu0 0.0
    %715 = vmatpush1.msra.mxu0 0.0
    %716 = vmatprep.subr.mxu0 0.0
    %717 = vmatpush1.msra.mxu0 0.0
    %718 = vmatprep.subr.mxu0 0.0
    %719 = vmatpush1.msra.mxu0 0.0
    %720 = vmatprep.subr.mxu0 0.0
    %721 = vmatpush1.msra.mxu0 0.0
    %722 = vmatprep.subr.mxu0 0.0
    %723 = vmatpush1.msra.mxu0 0.0
    %724 = vmatprep.subr.mxu0 %v693
    %725 = vmatpush1.msra.mxu0 %v692
    %726 = vmatprep.subr.mxu0 %v691
    %727 = vmatpush1.msra.mxu0 %v690
    %728 = vmatprep.subr.mxu0 %v689
    %729 = vmatpush1.msra.mxu0 %v688
    %730 = vmatprep.subr.mxu0 %v687
    %731 = vmatpush1.msra.mxu0 %v686
    %732 = vmatprep.subr.mxu0 0.0
    %733 = vmatpush2.msra.mxu0 0.0
    %734 = vmatprep.subr.mxu0 0.0
    %735 = vmatpush2.msra.mxu0 0.0
    %736 = vmatprep.subr.mxu0 0.0
    %737 = vmatpush2.msra.mxu0 0.0
    %738 = vmatprep.subr.mxu0 0.0
    %739 = vmatpush2.msra.mxu0 0.0
    %740 = vmatprep.subr.mxu0 0.0
    %741 = vmatpush2.msra.mxu0 0.0
    %742 = vmatprep.subr.mxu0 0.0
    %743 = vmatpush2.msra.mxu0 0.0
    %744 = vmatprep.subr.mxu0 0.0
    %745 = vmatpush2.msra.mxu0 0.0
    %746 = vmatprep.subr.mxu0 0.0
    %747 = vmatpush2.msra.mxu0 0.0
    %748 = vmatprep.subr.mxu0 0.0
    %749 = vmatpush2.msra.mxu0 0.0
    %750 = vmatprep.subr.mxu0 0.0
    %751 = vmatpush2.msra.mxu0 0.0
    %752 = vmatprep.subr.mxu0 0.0
    %753 = vmatpush2.msra.mxu0 0.0
    %754 = vmatprep.subr.mxu0 0.0
    %755 = vmatpush2.msra.mxu0 0.0
    %756 = vmatprep.subr.mxu0 0.0
    %757 = vmatpush2.msra.mxu0 0.0
    %758 = vmatprep.subr.mxu0 0.0
    %759 = vmatpush2.msra.mxu0 0.0
    %760 = vmatprep.subr.mxu0 0.0
    %761 = vmatpush2.msra.mxu0 0.0
    %762 = vmatprep.subr.mxu0 0.0
    %763 = vmatpush2.msra.mxu0 0.0
    %764 = vmatprep.mubr.f32.mxu0 0.0
    %765 = vmatmul.mubr.f32.gmra.mxu0 %v695
    %v766 = vpop.f32.mrf.mxu0
    %v767 = vadd.f32 0.0, %v766
    %v768 = vpop.f32.mrf.mxu0
    %v769 = vadd.f32 0.0, %v768
    %770 = vmatprep.mubr.f32.mxu0 0.0
    %771 = vmatmul.mubr.f32.gmra.mxu0 %v698
    %v772 = vpop.f32.mrf.mxu0
    %v773 = vadd.f32 0.0, %v772
    %v774 = vpop.f32.mrf.mxu0
    %v775 = vadd.f32 0.0, %v774
    %776 = vdwg.mxu0
    %v777 = vmul.f32 %v767, %v411
    %v778 = vmul.f32 %v769, %v417
    %v779 = vmul.f32 %v773, %v412
    %v780 = vmul.f32 %v775, %v418
    %v781 = vld [vmem:[%s5] sm:$0xff]
    %v782 = vld [vmem:[%s5 + $0x8] sm:$0xff]
    %v783 = vld [vmem:[%s5 + $0x10] sm:$0xff]
    %v784 = vld [vmem:[%s5 + $0x18] sm:$0xff]
    %v785 = vld [vmem:[%s5 + $0x20] sm:$0xff]
    %v786 = vld [vmem:[%s5 + $0x28] sm:$0xff]
    %v787 = vld [vmem:[%s5 + $0x30] sm:$0xff]
    %v788 = vld [vmem:[%s5 + $0x38] sm:$0xff]
    %v789 = vld [vmem:[%s5 + $0x40] sm:$0xff]
    %v790 = vld [vmem:[%s5 + $0x48] sm:$0xff]
    %v791 = vld [vmem:[%s5 + $0x50] sm:$0xff]
    %v792 = vld [vmem:[%s5 + $0x58] sm:$0xff]
    %v793 = vld [vmem:[%s5 + $0x60] sm:$0xff]
    %v794 = vld [vmem:[%s5 + $0x68] sm:$0xff]
    %v795 = vld [vmem:[%s5 + $0x70] sm:$0xff]
    %v796 = vld [vmem:[%s5 + $0x78] sm:$0xff]
    %v797 = vld [vmem:[%s5 + $0x80] sm:$0xff]
    %v798 = vld [vmem:[%s5 + $0x88] sm:$0xff]
    %v799 = vld [vmem:[%s5 + $0x90] sm:$0xff]
    %v800 = vld [vmem:[%s5 + $0x98] sm:$0xff]
    %v801 = vld [vmem:[%s5 + $0xa0] sm:$0xff]
    %v802 = vld [vmem:[%s5 + $0xa8] sm:$0xff]
    %v803 = vld [vmem:[%s5 + $0xb0] sm:$0xff]
    %v804 = vld [vmem:[%s5 + $0xb8] sm:$0xff]
    %v805 = vld [vmem:[%s5 + $0xc0] sm:$0xff]
    %v806 = vld [vmem:[%s5 + $0xc8] sm:$0xff]
    %v807 = vld [vmem:[%s5 + $0xd0] sm:$0xff]
    %v808 = vld [vmem:[%s5 + $0xd8] sm:$0xff]
    %v809 = vld [vmem:[%s5 + $0xe0] sm:$0xff]
    %v810 = vld [vmem:[%s5 + $0xe8] sm:$0xff]
    %v811 = vld [vmem:[%s5 + $0xf0] sm:$0xff]
    %v812 = vld [vmem:[%s5 + $0xf8] sm:$0xff]
    %v813 = vld [vmem:[%s6] sm:$0x1]
    %v815 = vlaneseq
    %v816 = vshrl.u32 %v815, 7
    %v817 = vsub.s32 0, %v816
    %v818 = vrot.slane %v813, %v817
    %820 = vmatprep.subr.mxu0 0.0
    %821 = vmatpush1.msra.mxu0 %v796
    %822 = vmatprep.subr.mxu0 0.0
    %823 = vmatpush1.msra.mxu0 %v795
    %824 = vmatprep.subr.mxu0 0.0
    %825 = vmatpush1.msra.mxu0 %v794
    %826 = vmatprep.subr.mxu0 0.0
    %827 = vmatpush1.msra.mxu0 %v793
    %828 = vmatprep.subr.mxu0 0.0
    %829 = vmatpush1.msra.mxu0 %v792
    %830 = vmatprep.subr.mxu0 0.0
    %831 = vmatpush1.msra.mxu0 %v791
    %832 = vmatprep.subr.mxu0 0.0
    %833 = vmatpush1.msra.mxu0 %v790
    %834 = vmatprep.subr.mxu0 0.0
    %835 = vmatpush1.msra.mxu0 %v789
    %836 = vmatprep.subr.mxu0 0.0
    %837 = vmatpush1.msra.mxu0 %v788
    %838 = vmatprep.subr.mxu0 0.0
    %839 = vmatpush1.msra.mxu0 %v787
    %840 = vmatprep.subr.mxu0 0.0
    %841 = vmatpush1.msra.mxu0 %v786
    %842 = vmatprep.subr.mxu0 0.0
    %843 = vmatpush1.msra.mxu0 %v785
    %844 = vmatprep.subr.mxu0 0.0
    %845 = vmatpush1.msra.mxu0 %v784
    %846 = vmatprep.subr.mxu0 0.0
    %847 = vmatpush1.msra.mxu0 %v783
    %848 = vmatprep.subr.mxu0 0.0
    %849 = vmatpush1.msra.mxu0 %v782
    %850 = vmatprep.subr.mxu0 0.0
    %851 = vmatpush1.msra.mxu0 %v781
    %852 = vmatprep.subr.mxu0 0.0
    %853 = vmatpush2.msra.mxu0 %v812
    %854 = vmatprep.subr.mxu0 0.0
    %855 = vmatpush2.msra.mxu0 %v811
    %856 = vmatprep.subr.mxu0 0.0
    %857 = vmatpush2.msra.mxu0 %v810
    %858 = vmatprep.subr.mxu0 0.0
    %859 = vmatpush2.msra.mxu0 %v809
    %860 = vmatprep.subr.mxu0 0.0
    %861 = vmatpush2.msra.mxu0 %v808
    %862 = vmatprep.subr.mxu0 0.0
    %863 = vmatpush2.msra.mxu0 %v807
    %864 = vmatprep.subr.mxu0 0.0
    %865 = vmatpush2.msra.mxu0 %v806
    %866 = vmatprep.subr.mxu0 0.0
    %867 = vmatpush2.msra.mxu0 %v805
    %868 = vmatprep.subr.mxu0 0.0
    %869 = vmatpush2.msra.mxu0 %v804
    %870 = vmatprep.subr.mxu0 0.0
    %871 = vmatpush2.msra.mxu0 %v803
    %872 = vmatprep.subr.mxu0 0.0
    %873 = vmatpush2.msra.mxu0 %v802
    %874 = vmatprep.subr.mxu0 0.0
    %875 = vmatpush2.msra.mxu0 %v801
    %876 = vmatprep.subr.mxu0 0.0
    %877 = vmatpush2.msra.mxu0 %v800
    %878 = vmatprep.subr.mxu0 0.0
    %879 = vmatpush2.msra.mxu0 %v799
    %880 = vmatprep.subr.mxu0 0.0
    %881 = vmatpush2.msra.mxu0 %v798
    %882 = vmatprep.subr.mxu0 0.0
    %883 = vmatpush2.msra.mxu0 %v797
    %884 = vmatprep.mubr.f32.mxu0 %v778
    %885 = vmatmul.mubr.f32.gmra.mxu0 %v777
    %v886 = vpop.f32.mrf.mxu0
    %v887 = vadd.f32 %v818, %v886
    %v888 = vpop.f32.mrf.mxu0
    %889 = vmatprep.mubr.f32.mxu0 %v780
    %890 = vmatmul.mubr.f32.gmra.mxu0 %v779
    %v891 = vpop.f32.mrf.mxu0
    %v892 = vadd.f32 %v818, %v891
    %v893 = vpop.f32.mrf.mxu0
    %894 = vdwg.mxu0
    %v895 = vadd.f32 %v887, %v83
    %v896 = vadd.f32 %v892, %v84
    %v897 = vsel %vm45, %v895, 0.0
    %898 = vadd.xlane.f32.xlu0 %v897
    %v899 = vpop.xlane.xlu0 %898
    %v900 = vsel %vm45, %v896, 0.0
    %901 = vadd.xlane.f32.xlu0 %v900
    %v902 = vpop.xlane.xlu0 %901
    %v903 = vmul.f32 %v899, %v52
    %v904 = vmul.f32 %v902, %v52
    %v905 = vsub.f32 %v895, %v903
    %v906 = vsub.f32 %v896, %v904
    %v907 = vmul.f32 %v905, %v905
    %v908 = vmul.f32 %v906, %v906
    %v909 = vsel %vm45, %v907, 0.0
    %910 = vadd.xlane.f32.xlu0 %v909
    %v911 = vpop.xlane.xlu0 %910
    %v912 = vsel %vm45, %v908, 0.0
    %913 = vadd.xlane.f32.xlu0 %v912
    %v914 = vpop.xlane.xlu0 %913
    %v915 = vmul.f32 %v911, %v52
    %v916 = vmul.f32 %v914, %v52
    %v917 = vadd.f32 %v915, 1e-05
    %v918 = vadd.f32 %v916, 1e-05
    %v919 = vrsqrt.pop %v917
    %v920 = vrsqrt.pop %v918
    %v921 = vmul.f32 %v905, %v919
    %v922 = vmul.f32 %v906, %v920
    %v923 = vld [vmem:[%s8] sm:$0xff]
    %v924 = vld [vmem:[%s8 + $0x8] sm:$0xff]
    %v925 = vld [vmem:[%s8 + $0x10] sm:$0xff]
    %v926 = vld [vmem:[%s8 + $0x18] sm:$0xff]
    %v927 = vld [vmem:[%s9] sm:$0x1]
    %v929 = vlaneseq
    %v930 = vshrl.u32 %v929, 7
    %v931 = vsub.s32 0, %v930
    %v932 = vrot.slane %v927, %v931
    %v935 = vsel %vm45, %v921, 0
    %v938 = vsel %vm45, %v922, 0
    %940 = vmatprep.subr.mxu0 0.0
    %941 = vmatpush1.msra.mxu0 0.0
    %942 = vmatprep.subr.mxu0 0.0
    %943 = vmatpush1.msra.mxu0 0.0
    %944 = vmatprep.subr.mxu0 0.0
    %945 = vmatpush1.msra.mxu0 0.0
    %946 = vmatprep.subr.mxu0 0.0
    %947 = vmatpush1.msra.mxu0 0.0
    %948 = vmatprep.subr.mxu0 0.0
    %949 = vmatpush1.msra.mxu0 0.0
    %950 = vmatprep.subr.mxu0 0.0
    %951 = vmatpush1.msra.mxu0 0.0
    %952 = vmatprep.subr.mxu0 0.0
    %953 = vmatpush1.msra.mxu0 0.0
    %954 = vmatprep.subr.mxu0 0.0
    %955 = vmatpush1.msra.mxu0 0.0
    %956 = vmatprep.subr.mxu0 0.0
    %957 = vmatpush1.msra.mxu0 0.0
    %958 = vmatprep.subr.mxu0 0.0
    %959 = vmatpush1.msra.mxu0 0.0
    %960 = vmatprep.subr.mxu0 0.0
    %961 = vmatpush1.msra.mxu0 0.0
    %962 = vmatprep.subr.mxu0 0.0
    %963 = vmatpush1.msra.mxu0 0.0
    %964 = vmatprep.subr.mxu0 0.0
    %965 = vmatpush1.msra.mxu0 %v926
    %966 = vmatprep.subr.mxu0 0.0
    %967 = vmatpush1.msra.mxu0 %v925
    %968 = vmatprep.subr.mxu0 0.0
    %969 = vmatpush1.msra.mxu0 %v924
    %970 = vmatprep.subr.mxu0 0.0
    %971 = vmatpush1.msra.mxu0 %v923
    %972 = vmatprep.subr.mxu0 0.0
    %973 = vmatpush2.msra.mxu0 0.0
    %974 = vmatprep.subr.mxu0 0.0
    %975 = vmatpush2.msra.mxu0 0.0
    %976 = vmatprep.subr.mxu0 0.0
    %977 = vmatpush2.msra.mxu0 0.0
    %978 = vmatprep.subr.mxu0 0.0
    %979 = vmatpush2.msra.mxu0 0.0
    %980 = vmatprep.subr.mxu0 0.0
    %981 = vmatpush2.msra.mxu0 0.0
    %982 = vmatprep.subr.mxu0 0.0
    %983 = vmatpush2.msra.mxu0 0.0
    %984 = vmatprep.subr.mxu0 0.0
    %985 = vmatpush2.msra.mxu0 0.0
    %986 = vmatprep.subr.mxu0 0.0
    %987 = vmatpush2.msra.mxu0 0.0
    %988 = vmatprep.subr.mxu0 0.0
    %989 = vmatpush2.msra.mxu0 0.0
    %990 = vmatprep.subr.mxu0 0.0
    %991 = vmatpush2.msra.mxu0 0.0
    %992 = vmatprep.subr.mxu0 0.0
    %993 = vmatpush2.msra.mxu0 0.0
    %994 = vmatprep.subr.mxu0 0.0
    %995 = vmatpush2.msra.mxu0 0.0
    %996 = vmatprep.subr.mxu0 0.0
    %997 = vmatpush2.msra.mxu0 0.0
    %998 = vmatprep.subr.mxu0 0.0
    %999 = vmatpush2.msra.mxu0 0.0
    %1000 = vmatprep.subr.mxu0 0.0
    %1001 = vmatpush2.msra.mxu0 0.0
    %1002 = vmatprep.subr.mxu0 0.0
    %1003 = vmatpush2.msra.mxu0 0.0
    %1004 = vmatprep.mubr.f32.mxu0 0.0
    %1005 = vmatmul.mubr.f32.gmra.mxu0 %v935
    %v1006 = vpop.f32.mrf.mxu0
    %v1007 = vadd.f32 %v932, %v1006
    %v1008 = vpop.f32.mrf.mxu0
    %1009 = vmatprep.mubr.f32.mxu0 0.0
    %1010 = vmatmul.mubr.f32.gmra.mxu0 %v938
    %v1011 = vpop.f32.mrf.mxu0
    %v1012 = vadd.f32 %v932, %v1011
    %v1013 = vpop.f32.mrf.mxu0
    %1014 = vdwg.mxu0
    %vm1015 = vcmp.ge.f32.partialorder %v1007, 0.0
    %vm1016 = vcmp.ge.f32.partialorder %v1012, 0.0
    %v1017 = vmul.f32 %v1007, 0.01
    %v1018 = vmul.f32 %v1012, 0.01
    %v1019 = vsel %vm1015, %v1007, %v1017
    %v1020 = vsel %vm1016, %v1012, %v1018
    %v1021 = vld [vmem:[%s10] sm:$0xff]
    %v1022 = vld [vmem:[%s10 + $0x8] sm:$0xff]
    %v1023 = vld [vmem:[%s10 + $0x10] sm:$0xff]
    %v1024 = vld [vmem:[%s10 + $0x18] sm:$0xff]
    %v1025 = vld [vmem:[%s10 + $0x20] sm:$0xff]
    %v1026 = vld [vmem:[%s10 + $0x28] sm:$0xff]
    %v1027 = vld [vmem:[%s10 + $0x30] sm:$0xff]
    %v1028 = vld [vmem:[%s10 + $0x38] sm:$0xff]
    %v1029 = vld [vmem:[%s10 + $0x40] sm:$0xff]
    %v1030 = vld [vmem:[%s10 + $0x48] sm:$0xff]
    %v1031 = vld [vmem:[%s10 + $0x50] sm:$0xff]
    %v1032 = vld [vmem:[%s10 + $0x58] sm:$0xff]
    %v1033 = vld [vmem:[%s10 + $0x60] sm:$0xff]
    %v1034 = vld [vmem:[%s10 + $0x68] sm:$0xff]
    %v1035 = vld [vmem:[%s10 + $0x70] sm:$0xff]
    %v1036 = vld [vmem:[%s10 + $0x78] sm:$0xff]
    %v1037 = vld [vmem:[%s11] sm:$0x1]
    %v1039 = vlaneseq
    %v1040 = vshrl.u32 %v1039, 7
    %v1041 = vsub.s32 0, %v1040
    %v1042 = vrot.slane %v1037, %v1041
    %1044 = vmatprep.subr.mxu0 0.0
    %1045 = vmatpush1.msra.mxu0 %v1036
    %1046 = vmatprep.subr.mxu0 0.0
    %1047 = vmatpush1.msra.mxu0 %v1035
    %1048 = vmatprep.subr.mxu0 0.0
    %1049 = vmatpush1.msra.mxu0 %v1034
    %1050 = vmatprep.subr.mxu0 0.0
    %1051 = vmatpush1.msra.mxu0 %v1033
    %1052 = vmatprep.subr.mxu0 0.0
    %1053 = vmatpush1.msra.mxu0 %v1032
    %1054 = vmatprep.subr.mxu0 0.0
    %1055 = vmatpush1.msra.mxu0 %v1031
    %1056 = vmatprep.subr.mxu0 0.0
    %1057 = vmatpush1.msra.mxu0 %v1030
    %1058 = vmatprep.subr.mxu0 0.0
    %1059 = vmatpush1.msra.mxu0 %v1029
    %1060 = vmatprep.subr.mxu0 0.0
    %1061 = vmatpush1.msra.mxu0 %v1028
    %1062 = vmatprep.subr.mxu0 0.0
    %1063 = vmatpush1.msra.mxu0 %v1027
    %1064 = vmatprep.subr.mxu0 0.0
    %1065 = vmatpush1.msra.mxu0 %v1026
    %1066 = vmatprep.subr.mxu0 0.0
    %1067 = vmatpush1.msra.mxu0 %v1025
    %1068 = vmatprep.subr.mxu0 0.0
    %1069 = vmatpush1.msra.mxu0 %v1024
    %1070 = vmatprep.subr.mxu0 0.0
    %1071 = vmatpush1.msra.mxu0 %v1023
    %1072 = vmatprep.subr.mxu0 0.0
    %1073 = vmatpush1.msra.mxu0 %v1022
    %1074 = vmatprep.subr.mxu0 0.0
    %1075 = vmatpush1.msra.mxu0 %v1021
    %1076 = vmatprep.subr.mxu0 0.0
    %1077 = vmatpush2.msra.mxu0 0.0
    %1078 = vmatprep.subr.mxu0 0.0
    %1079 = vmatpush2.msra.mxu0 0.0
    %1080 = vmatprep.subr.mxu0 0.0
    %1081 = vmatpush2.msra.mxu0 0.0
    %1082 = vmatprep.subr.mxu0 0.0
    %1083 = vmatpush2.msra.mxu0 0.0
    %1084 = vmatprep.subr.mxu0 0.0
    %1085 = vmatpush2.msra.mxu0 0.0
    %1086 = vmatprep.subr.mxu0 0.0
    %1087 = vmatpush2.msra.mxu0 0.0
    %1088 = vmatprep.subr.mxu0 0.0
    %1089 = vmatpush2.msra.mxu0 0.0
    %1090 = vmatprep.subr.mxu0 0.0
    %1091 = vmatpush2.msra.mxu0 0.0
    %1092 = vmatprep.subr.mxu0 0.0
    %1093 = vmatpush2.msra.mxu0 0.0
    %1094 = vmatprep.subr.mxu0 0.0
    %1095 = vmatpush2.msra.mxu0 0.0
    %1096 = vmatprep.subr.mxu0 0.0
    %1097 = vmatpush2.msra.mxu0 0.0
    %1098 = vmatprep.subr.mxu0 0.0
    %1099 = vmatpush2.msra.mxu0 0.0
    %1100 = vmatprep.subr.mxu0 0.0
    %1101 = vmatpush2.msra.mxu0 0.0
    %1102 = vmatprep.subr.mxu0 0.0
    %1103 = vmatpush2.msra.mxu0 0.0
    %1104 = vmatprep.subr.mxu0 0.0
    %1105 = vmatpush2.msra.mxu0 0.0
    %1106 = vmatprep.subr.mxu0 0.0
    %1107 = vmatpush2.msra.mxu0 0.0
    %1108 = vmatprep.mubr.f32.mxu0 0.0
    %1109 = vmatmul.mubr.f32.gmra.mxu0 %v1019
    %v1110 = vpop.f32.mrf.mxu0
    %v1111 = vadd.f32 %v1042, %v1110
    %v1112 = vpop.f32.mrf.mxu0
    %1113 = vmatprep.mubr.f32.mxu0 0.0
    %1114 = vmatmul.mubr.f32.gmra.mxu0 %v1020
    %v1115 = vpop.f32.mrf.mxu0
    %v1116 = vadd.f32 %v1042, %v1115
    %v1117 = vpop.f32.mrf.mxu0
    %1118 = vdwg.mxu0
    %1119 = vst.msk [vmem:[#allocation2] sm:$0xff] %vm45, %v1111
    %1120 = vst.msk [vmem:[#allocation2 + $0x8] sm:$0xff] %vm45, %v1116
    // Predicated region
    $region50: #{tpu_custom_call.1} parent=1 // pred_check
      _
    $region51: #{tpu_custom_call.1} parent=1 // pred_check_branch
      %1122 = sbr.rel (0) target = $region53
    $region52: #{tpu_custom_call.1} parent=1 // pred_region
      %s1124 = ssub.s32 256, 256
      %1125 = vsyncadd [#allocation3], %s1124
      %s1126 = sshll.u32 [#allocation2], 4
      %s1127 = int_to_ptr.vmem [resolvable:$true] %s1126
      %1132 = dma.vmem_to_hbm [thread:$0]  %s1127, 256, %s12, [#allocation3], 128, 128, 8
    $region53: #{tpu_custom_call.1} parent=1 // pred_fallthru
      _
    // Predicated region
    $region54: #{tpu_custom_call.1} parent=1 // pred_check
      _
    $region55: #{tpu_custom_call.1} parent=1 // pred_check_branch
      %1134 = sbr.rel (0) target = $region57
    $region56: #{tpu_custom_call.1} parent=1 // pred_region
      %1135 = dma.done [#allocation3], 256
    $region57: #{tpu_custom_call.1} parent=1 // pred_fallthru
      _
    %1136 = vsyncpa [#allocation3], 1

</llo_original>
